<compile_context>
chip_gen: v5e
topology: v5e:2x2
jax: 0.10.0
libtpu: 0.0.40
codegen_flags: <defaults>
</compile_context>

<pallas_src>
import functools
import math

import jax
import jax.numpy as jnp
from jax.experimental import pallas as pl
from jax.experimental.pallas import tpu as pltpu


def pair(t):
    return t if isinstance(t, tuple) else (t, t)


# ----------------------------------------------------------------------------
# In-kernel helpers (all f32)
# ----------------------------------------------------------------------------
def _layernorm(x, g, b, eps=1e-5):
    mu = jnp.mean(x, axis=-1, keepdims=True)
    xc = x - mu
    var = jnp.mean(xc * xc, axis=-1, keepdims=True)
    return xc * jax.lax.rsqrt(var + eps) * g + b


def _gelu(x):
    # TODO(synk): torch nn.GELU() defaults to exact erf GELU; tanh approximation
    # used here (erf lowering in Mosaic not relied upon).
    c = math.sqrt(2.0 / math.pi)
    return 0.5 * x * (1.0 + jnp.tanh(c * (x + 0.044715 * x * x * x)))


# ----------------------------------------------------------------------------
# Fused ViT kernel: grid = (batch, depth); one grid step == one transformer
# layer for one image.  Activation lives in VMEM scratch across depth.
# ----------------------------------------------------------------------------
def _fused_vit_kernel(
        tok_ref,                                        # (1, N, D) pre-embedded tokens
        ln1g_ref, ln1b_ref, wq_ref, wk_ref, wv_ref,     # per-layer attention weights
        wout_ref, bout_ref,
        ln2g_ref, ln2b_ref, w1_ref, b1_ref, w2_ref, b2_ref,   # per-layer FF weights
        o_ref, x_scratch,
        *, heads, dim_head, scale):
    l = pl.program_id(1)
    last = pl.num_programs(1) - 1
    N, D = x_scratch.shape

    # --- layer 0: load pre-embedded tokens into the VMEM-resident activation
    @pl.when(l == 0)
    def _():
        x_scratch[...] = tok_ref[0]
        # emb_dropout: identity (p = 0.0 / eval mode)

    x = x_scratch[...]                                   # (N, D) f32

    # --- PreNorm(Attention) + residual ---------------------------------------
    xn = _layernorm(x, ln1g_ref[0], ln1b_ref[0])
    xn_b = jnp.broadcast_to(xn.astype(jnp.bfloat16)[None], (heads, N, D))

    # batched per-head projections: (heads, N, D) x (heads, D, dh) -> (heads, N, dh)
    q = jnp.einsum('hnd,hde->hne', xn_b, wq_ref[0],
                   preferred_element_type=jnp.float32)
    k = jnp.einsum('hnd,hde->hne', xn_b, wk_ref[0],
                   preferred_element_type=jnp.float32)
    v = jnp.einsum('hnd,hde->hne', xn_b, wv_ref[0],
                   preferred_element_type=jnp.float32)

    dots = jnp.einsum('hqe,hke->hqk',
                      q.astype(jnp.bfloat16), k.astype(jnp.bfloat16),
                      preferred_element_type=jnp.float32) * scale   # (heads, N, N)
    dots = dots - jnp.max(dots, axis=-1, keepdims=True)
    e = jnp.exp(dots)
    attn = e * pl.reciprocal(jnp.sum(e, axis=-1, keepdims=True), approx=True)
    # attn dropout: identity (p = 0.0 / eval mode)

    o_heads = jnp.einsum('hqk,hke->hqe',
                         attn.astype(jnp.bfloat16), v.astype(jnp.bfloat16),
                         preferred_element_type=jnp.float32)        # (heads, N, dh)

    # output projection: accumulate per head (major-dim slices, no lane concat)
    wout = wout_ref[0]                                   # (heads, dh, D) bf16
    y = bout_ref[0]                                      # (1, D) f32, broadcasts
    for h in range(heads):                               # static unroll (heads small)
        y = y + jnp.dot(o_heads[h].astype(jnp.bfloat16), wout[h],
                        preferred_element_type=jnp.float32)
    x = x + y                                            # residual (f32)

    # --- PreNorm(FeedForward) + residual --------------------------------------
    xn2 = _layernorm(x, ln2g_ref[0], ln2b_ref[0])
    h1 = jnp.dot(xn2.astype(jnp.bfloat16), w1_ref[0],
                 preferred_element_type=jnp.float32) + b1_ref[0]
    h1 = _gelu(h1)
    y2 = jnp.dot(h1.astype(jnp.bfloat16), w2_ref[0],
                 preferred_element_type=jnp.float32) + b2_ref[0]
    x = x + y2                                           # residual (f32)

    @pl.when(l < last)
    def _():
        x_scratch[...] = x

    @pl.when(l == last)
    def _():
        o_ref[0] = x


# ----------------------------------------------------------------------------
# Parameters (deterministic, synthetic).  MXU weights stored in bfloat16.
# ----------------------------------------------------------------------------
def init_params(key, *, image_size, patch_size, dim, depth, heads, dim_head,
                mlp_dim, in_chans=3):
    H, W = pair(image_size)
    ph, pw = pair(patch_size)
    # mirrors CXRTransformer.__init__ : num_patches = H/ph * W/pw + 1
    num_patches = (H // ph) * (W // pw) + 1
    patch_dim = ph * pw * in_chans

    keys = jax.random.split(key, 9)

    def lin_bf16(k, shape):
        return (0.02 * jax.random.normal(k, shape, jnp.float32)).astype(jnp.bfloat16)

    return {
        "pos_embedding": jax.random.normal(
            keys[0], (1, num_patches + 1, dim), jnp.float32),
        "cls_token": jax.random.normal(keys[1], (1, 1, dim), jnp.float32),
        "patch_w": 0.02 * jax.random.normal(keys[2], (patch_dim, dim), jnp.float32),
        "patch_b": jnp.zeros((dim,), jnp.float32),
        # depth-stacked layer parameters
        "ln1_g": jnp.ones((depth, 1, dim), jnp.float32),
        "ln1_b": jnp.zeros((depth, 1, dim), jnp.float32),
        # to_qkv (Linear(dim, 3*inner), no bias) split per head / per q,k,v
        "wq": lin_bf16(keys[3], (depth, heads, dim, dim_head)),
        "wk": lin_bf16(keys[4], (depth, heads, dim, dim_head)),
        "wv": lin_bf16(keys[5], (depth, heads, dim, dim_head)),
        # to_out Linear(inner, dim): (inner, dim) reshaped to (heads, dh, dim)
        "wout": lin_bf16(keys[6], (depth, heads, dim_head, dim)),
        "bout": jnp.zeros((depth, 1, dim), jnp.float32),
        "ln2_g": jnp.ones((depth, 1, dim), jnp.float32),
        "ln2_b": jnp.zeros((depth, 1, dim), jnp.float32),
        "w1": lin_bf16(keys[7], (depth, dim, mlp_dim)),
        "b1": jnp.zeros((depth, 1, mlp_dim), jnp.float32),
        "w2": lin_bf16(keys[8], (depth, mlp_dim, dim)),
        "b2": jnp.zeros((depth, 1, dim), jnp.float32),
    }


# ----------------------------------------------------------------------------
# Forward pass: patch extraction + embedding in plain JAX (one-shot XLA GEMM),
# all transformer layers in one fused Pallas kernel.
# ----------------------------------------------------------------------------
def cxr_transformer_forward(img, params, *, patch_size, heads, dim_head):
    B, C, H, W = img.shape
    p = patch_size
    # 'b c (h p1) (w p2) -> b (h w) (p1 p2 c)'
    x = img.reshape(B, C, H // p, p, W // p, p)
    x = x.transpose(0, 2, 4, 3, 5, 1)
    nP = (H // p) * (W // p)
    patch_dim = p * p * C
    patches = x.reshape(B, nP, patch_dim)

    N = nP + 1
    D = params["patch_w"].shape[1]
    depth = params["wq"].shape[0]
    mlp_dim = params["w1"].shape[-1]

    # patch embedding + cls token + positional embedding (one-shot, outside kernel)
    tok = jnp.einsum('bnp,pd->bnd', patches, params["patch_w"]) + params["patch_b"]
    cls = jnp.broadcast_to(params["cls_token"], (B, 1, D))
    x0 = (jnp.concatenate([cls, tok], axis=1)
          + params["pos_embedding"][:, :N]).astype(jnp.float32)   # (B, N, D)
    # emb_dropout: identity (p = 0.0 / eval mode)

    def per_batch(*shape):
        return pl.BlockSpec((1,) + shape, lambda b, l: (b,) + (0,) * len(shape))

    def per_layer(*shape):
        return pl.BlockSpec((1,) + shape, lambda b, l: (l,) + (0,) * len(shape))

    kernel = functools.partial(_fused_vit_kernel, heads=heads,
                               dim_head=dim_head, scale=dim_head ** -0.5)

    # TODO(synk): toy shapes (D=32, mlp=64, N=5) are lane-masked; pad D/mlp to
    # multiples of 128 for realistic deployments.
    v_cxr = pl.pallas_call(
        kernel,
        out_shape=jax.ShapeDtypeStruct((B, N, D), jnp.float32),
        grid=(B, depth),
        in_specs=[
            per_batch(N, D),                    # pre-embedded tokens
            per_layer(1, D),                    # ln1_g
            per_layer(1, D),                    # ln1_b
            per_layer(heads, D, dim_head),      # wq
            per_layer(heads, D, dim_head),      # wk
            per_layer(heads, D, dim_head),      # wv
            per_layer(heads, dim_head, D),      # wout
            per_layer(1, D),                    # bout
            per_layer(1, D),                    # ln2_g
            per_layer(1, D),                    # ln2_b
            per_layer(D, mlp_dim),              # w1
            per_layer(1, mlp_dim),              # b1
            per_layer(mlp_dim, D),              # w2
            per_layer(1, D),                    # b2
        ],
        out_specs=pl.BlockSpec((1, N, D), lambda b, l: (b, 0, 0)),
        scratch_shapes=[pltpu.VMEM((N, D), jnp.float32)],
        compiler_params=pltpu.CompilerParams(
            # batch axis feeds the second TensorCore on v7x; depth carries
            # state in x_scratch and must stay sequential.
            dimension_semantics=("parallel", "arbitrary"),
            vmem_limit_bytes=32 * 1024 * 1024),
    )(x0, params["ln1_g"], params["ln1_b"], params["wq"], params["wk"],
      params["wv"], params["wout"], params["bout"], params["ln2_g"],
      params["ln2_b"], params["w1"], params["b1"], params["w2"], params["b2"])

    cls_out = v_cxr[:, 0]            # to_latent is Identity
    return v_cxr, cls_out


# ----------------------------------------------------------------------------
if __name__ == "__main__":
    image_size, patch_size = 16, 8
    dim, depth, heads, dim_head, mlp_dim = 32, 2, 4, 8, 64
    B = 2

    key = jax.random.PRNGKey(0)
    k_img, k_par = jax.random.split(key)
    img = jax.random.normal(k_img, (B, 3, image_size, image_size), jnp.float32)

    params = init_params(k_par, image_size=image_size, patch_size=patch_size,
                         dim=dim, depth=depth, heads=heads, dim_head=dim_head,
                         mlp_dim=mlp_dim)

    fwd = jax.jit(functools.partial(cxr_transformer_forward,
                                    patch_size=patch_size, heads=heads,
                                    dim_head=dim_head))
    v_cxr, cls = fwd(img, params)
    jax.block_until_ready((v_cxr, cls))

    assert v_cxr.shape == (B, (image_size // patch_size) ** 2 + 1, dim)
    assert cls.shape == (B, dim)
    assert bool(jnp.all(jnp.isfinite(v_cxr)))
    print("KERNEL_OK")
</pallas_src>

<mosaic_0001>
module attributes {stable_mosaic.version = 11 : i64} {
  func.func @_fused_vit_kernel(%arg0: i32, %arg1: i32, %arg2: memref<1x5x32xf32, #tpu.memory_space<vmem>>, %arg3: memref<1x1x32xf32, #tpu.memory_space<vmem>>, %arg4: memref<1x1x32xf32, #tpu.memory_space<vmem>>, %arg5: memref<1x4x32x8xbf16, #tpu.memory_space<vmem>>, %arg6: memref<1x4x32x8xbf16, #tpu.memory_space<vmem>>, %arg7: memref<1x4x32x8xbf16, #tpu.memory_space<vmem>>, %arg8: memref<1x4x8x32xbf16, #tpu.memory_space<vmem>>, %arg9: memref<1x1x32xf32, #tpu.memory_space<vmem>>, %arg10: memref<1x1x32xf32, #tpu.memory_space<vmem>>, %arg11: memref<1x1x32xf32, #tpu.memory_space<vmem>>, %arg12: memref<1x32x64xbf16, #tpu.memory_space<vmem>>, %arg13: memref<1x1x64xf32, #tpu.memory_space<vmem>>, %arg14: memref<1x64x32xbf16, #tpu.memory_space<vmem>>, %arg15: memref<1x1x32xf32, #tpu.memory_space<vmem>>, %arg16: memref<1x5x32xf32, #tpu.memory_space<vmem>>, %arg17: memref<5x32xf32, #tpu.memory_space<vmem>>) attributes {dimension_semantics = [#tpu.dimension_semantics<parallel>, #tpu.dimension_semantics<arbitrary>], iteration_bounds = array<i64: 2, 2>, scalar_prefetch = 0 : i64, scratch_operands = 1 : i64, tpu.core_type = #tpu.core_type<tc>, window_params = [{transform_indices = @transform_0, window_bounds = array<i64: 1, 5, 32>}, {transform_indices = @transform_1, window_bounds = array<i64: 1, 1, 32>}, {transform_indices = @transform_2, window_bounds = array<i64: 1, 1, 32>}, {transform_indices = @transform_3, window_bounds = array<i64: 1, 4, 32, 8>}, {transform_indices = @transform_4, window_bounds = array<i64: 1, 4, 32, 8>}, {transform_indices = @transform_5, window_bounds = array<i64: 1, 4, 32, 8>}, {transform_indices = @transform_6, window_bounds = array<i64: 1, 4, 8, 32>}, {transform_indices = @transform_7, window_bounds = array<i64: 1, 1, 32>}, {transform_indices = @transform_8, window_bounds = array<i64: 1, 1, 32>}, {transform_indices = @transform_9, window_bounds = array<i64: 1, 1, 32>}, {transform_indices = @transform_10, window_bounds = array<i64: 1, 32, 64>}, {transform_indices = @transform_11, window_bounds = array<i64: 1, 1, 64>}, {transform_indices = @transform_12, window_bounds = array<i64: 1, 64, 32>}, {transform_indices = @transform_13, window_bounds = array<i64: 1, 1, 32>}, {transform_indices = @transform_14, window_bounds = array<i64: 1, 5, 32>}]} {
    %c0_i32 = arith.constant 0 : i32
    %0 = arith.cmpi eq, %arg1, %c0_i32 : i32
    %1 = arith.extui %0 : i1 to i32
    %c0_i32_0 = arith.constant 0 : i32
    %2 = arith.cmpi ne, %1, %c0_i32_0 : i32
    scf.if %2 {
      %c0_75 = arith.constant 0 : index
      %c0_76 = arith.constant 0 : index
      %c0_77 = arith.constant 0 : index
      %153 = vector.load %arg2[%c0_75, %c0_76, %c0_77] : memref<1x5x32xf32, #tpu.memory_space<vmem>>, vector<1x5x32xf32>
      %154 = vector.shape_cast %153 : vector<1x5x32xf32> to vector<5x32xf32>
      %c0_78 = arith.constant 0 : index
      %c0_79 = arith.constant 0 : index
      %155 = vector.load %arg17[%c0_78, %c0_79] : memref<5x32xf32, #tpu.memory_space<vmem>>, vector<5x32xf32>
      tpu.vector_store %arg17[%c0_78, %c0_79], %154 {strides = array<i32>} : memref<5x32xf32, #tpu.memory_space<vmem>>, vector<5x32xf32>,
    } else {
    }
    %c0 = arith.constant 0 : index
    %c0_1 = arith.constant 0 : index
    %3 = vector.load %arg17[%c0, %c0_1] : memref<5x32xf32, #tpu.memory_space<vmem>>, vector<5x32xf32>
    %c0_2 = arith.constant 0 : index
    %c0_3 = arith.constant 0 : index
    %c0_4 = arith.constant 0 : index
    %4 = vector.load %arg3[%c0_2, %c0_3, %c0_4] : memref<1x1x32xf32, #tpu.memory_space<vmem>>, vector<1x1x32xf32>
    %5 = vector.shape_cast %4 : vector<1x1x32xf32> to vector<1x32xf32>
    %c0_5 = arith.constant 0 : index
    %c0_6 = arith.constant 0 : index
    %c0_7 = arith.constant 0 : index
    %6 = vector.load %arg4[%c0_5, %c0_6, %c0_7] : memref<1x1x32xf32, #tpu.memory_space<vmem>>, vector<1x1x32xf32>
    %7 = vector.shape_cast %6 : vector<1x1x32xf32> to vector<1x32xf32>
    %cst = arith.constant dense<0.000000e+00> : vector<5xf32>
    %8 = vector.multi_reduction <add>, %3, %cst [1] : vector<5x32xf32> to vector<5xf32>
    %9 = vector.shape_cast %8 : vector<5xf32> to vector<5x1xf32>
    %cst_8 = arith.constant 3.200000e+01 : f32
    %10 = vector.broadcast %cst_8 : f32 to vector<5x1xf32>
    %11 = arith.divf %9, %10 : vector<5x1xf32>
    %12 = vector.broadcast %11 : vector<5x1xf32> to vector<5x32xf32>
    %13 = arith.subf %3, %12 : vector<5x32xf32>
    %14 = arith.mulf %13, %13 : vector<5x32xf32>
    %cst_9 = arith.constant dense<0.000000e+00> : vector<5xf32>
    %15 = vector.multi_reduction <add>, %14, %cst_9 [1] : vector<5x32xf32> to vector<5xf32>
    %16 = vector.shape_cast %15 : vector<5xf32> to vector<5x1xf32>
    %cst_10 = arith.constant 3.200000e+01 : f32
    %17 = vector.broadcast %cst_10 : f32 to vector<5x1xf32>
    %18 = arith.divf %16, %17 : vector<5x1xf32>
    %cst_11 = arith.constant 9.99999974E-6 : f32
    %19 = vector.broadcast %cst_11 : f32 to vector<5x1xf32>
    %20 = arith.addf %18, %19 : vector<5x1xf32>
    %21 = math.rsqrt %20 : vector<5x1xf32>
    %22 = vector.broadcast %21 : vector<5x1xf32> to vector<5x32xf32>
    %23 = arith.mulf %13, %22 : vector<5x32xf32>
    %24 = vector.broadcast %5 : vector<1x32xf32> to vector<5x32xf32>
    %25 = arith.mulf %23, %24 : vector<5x32xf32>
    %26 = vector.broadcast %7 : vector<1x32xf32> to vector<5x32xf32>
    %27 = arith.addf %25, %26 : vector<5x32xf32>
    %28 = arith.truncf %27 : vector<5x32xf32> to vector<5x32xbf16>
    %29 = vector.shape_cast %28 : vector<5x32xbf16> to vector<1x5x32xbf16>
    %30 = vector.shape_cast %29 : vector<1x5x32xbf16> to vector<1x5x32xbf16>
    %31 = vector.broadcast %30 : vector<1x5x32xbf16> to vector<4x5x32xbf16>
    %c0_12 = arith.constant 0 : index
    %c0_13 = arith.constant 0 : index
    %c0_14 = arith.constant 0 : index
    %c0_15 = arith.constant 0 : index
    %32 = vector.load %arg5[%c0_12, %c0_13, %c0_14, %c0_15] : memref<1x4x32x8xbf16, #tpu.memory_space<vmem>>, vector<1x4x32x8xbf16>
    %33 = vector.shape_cast %32 : vector<1x4x32x8xbf16> to vector<4x32x8xbf16>
    "tpu.trace_start"() <{level = 10 : i32, message = "hnd,hde->hne"}> : () -> ()
    %cst_16 = arith.constant dense<0.000000e+00> : vector<4x5x8xf32>
    %34 = tpu.matmul %31, %33, %cst_16 {dimension_numbers = #tpu.dot_dimension_numbers<[2], [1], [1], [2], [0, 0, 0, 1, 1, 2], [0], [0]>} : vector<4x5x32xbf16>, vector<4x32x8xbf16>, vector<4x5x8xf32> -> vector<4x5x8xf32>
    "tpu.trace_stop"() : () -> ()
    %c0_17 = arith.constant 0 : index
    %c0_18 = arith.constant 0 : index
    %c0_19 = arith.constant 0 : index
    %c0_20 = arith.constant 0 : index
    %35 = vector.load %arg6[%c0_17, %c0_18, %c0_19, %c0_20] : memref<1x4x32x8xbf16, #tpu.memory_space<vmem>>, vector<1x4x32x8xbf16>
    %36 = vector.shape_cast %35 : vector<1x4x32x8xbf16> to vector<4x32x8xbf16>
    "tpu.trace_start"() <{level = 10 : i32, message = "hnd,hde->hne"}> : () -> ()
    %cst_21 = arith.constant dense<0.000000e+00> : vector<4x5x8xf32>
    %37 = tpu.matmul %31, %36, %cst_21 {dimension_numbers = #tpu.dot_dimension_numbers<[2], [1], [1], [2], [0, 0, 0, 1, 1, 2], [0], [0]>} : vector<4x5x32xbf16>, vector<4x32x8xbf16>, vector<4x5x8xf32> -> vector<4x5x8xf32>
    "tpu.trace_stop"() : () -> ()
    %c0_22 = arith.constant 0 : index
    %c0_23 = arith.constant 0 : index
    %c0_24 = arith.constant 0 : index
    %c0_25 = arith.constant 0 : index
    %38 = vector.load %arg7[%c0_22, %c0_23, %c0_24, %c0_25] : memref<1x4x32x8xbf16, #tpu.memory_space<vmem>>, vector<1x4x32x8xbf16>
    %39 = vector.shape_cast %38 : vector<1x4x32x8xbf16> to vector<4x32x8xbf16>
    "tpu.trace_start"() <{level = 10 : i32, message = "hnd,hde->hne"}> : () -> ()
    %cst_26 = arith.constant dense<0.000000e+00> : vector<4x5x8xf32>
    %40 = tpu.matmul %31, %39, %cst_26 {dimension_numbers = #tpu.dot_dimension_numbers<[2], [1], [1], [2], [0, 0, 0, 1, 1, 2], [0], [0]>} : vector<4x5x32xbf16>, vector<4x32x8xbf16>, vector<4x5x8xf32> -> vector<4x5x8xf32>
    "tpu.trace_stop"() : () -> ()
    %41 = arith.truncf %34 : vector<4x5x8xf32> to vector<4x5x8xbf16>
    %42 = arith.truncf %37 : vector<4x5x8xf32> to vector<4x5x8xbf16>
    "tpu.trace_start"() <{level = 10 : i32, message = "hqe,hke->hqk"}> : () -> ()
    %cst_27 = arith.constant dense<0.000000e+00> : vector<4x5x5xf32>
    %43 = tpu.matmul %41, %42, %cst_27 {dimension_numbers = #tpu.dot_dimension_numbers<[2], [2], [1], [1], [0, 0, 0, 1, 1, 1], [0], [0]>} : vector<4x5x8xbf16>, vector<4x5x8xbf16>, vector<4x5x5xf32> -> vector<4x5x5xf32>
    "tpu.trace_stop"() : () -> ()
    %cst_28 = arith.constant 0.353553385 : f32
    %44 = vector.broadcast %cst_28 : f32 to vector<4x5x5xf32>
    %45 = arith.mulf %43, %44 : vector<4x5x5xf32>
    %cst_29 = arith.constant dense<0xFF800000> : vector<4x5xf32>
    %46 = vector.multi_reduction <maximumf>, %45, %cst_29 [2] : vector<4x5x5xf32> to vector<4x5xf32>
    %47 = vector.shape_cast %46 : vector<4x5xf32> to vector<4x5x1xf32>
    %48 = vector.broadcast %47 : vector<4x5x1xf32> to vector<4x5x5xf32>
    %49 = arith.subf %45, %48 : vector<4x5x5xf32>
    %50 = math.exp %49 : vector<4x5x5xf32>
    %cst_30 = arith.constant dense<0.000000e+00> : vector<4x5xf32>
    %51 = vector.multi_reduction <add>, %50, %cst_30 [2] : vector<4x5x5xf32> to vector<4x5xf32>
    %52 = vector.shape_cast %51 : vector<4x5xf32> to vector<4x5x1xf32>
    %53 = tpu.reciprocal %52 {approx = true} : vector<4x5x1xf32> -> vector<4x5x1xf32>
    %54 = vector.broadcast %53 : vector<4x5x1xf32> to vector<4x5x5xf32>
    %55 = arith.mulf %50, %54 : vector<4x5x5xf32>
    %56 = arith.truncf %55 : vector<4x5x5xf32> to vector<4x5x5xbf16>
    %57 = arith.truncf %40 : vector<4x5x8xf32> to vector<4x5x8xbf16>
    "tpu.trace_start"() <{level = 10 : i32, message = "hqk,hke->hqe"}> : () -> ()
    %cst_31 = arith.constant dense<0.000000e+00> : vector<4x5x8xf32>
    %58 = tpu.matmul %56, %57, %cst_31 {dimension_numbers = #tpu.dot_dimension_numbers<[2], [1], [1], [2], [0, 0, 0, 1, 1, 2], [0], [0]>} : vector<4x5x5xbf16>, vector<4x5x8xbf16>, vector<4x5x8xf32> -> vector<4x5x8xf32>
    "tpu.trace_stop"() : () -> ()
    %c0_32 = arith.constant 0 : index
    %c0_33 = arith.constant 0 : index
    %c0_34 = arith.constant 0 : index
    %c0_35 = arith.constant 0 : index
    %59 = vector.load %arg8[%c0_32, %c0_33, %c0_34, %c0_35] : memref<1x4x8x32xbf16, #tpu.memory_space<vmem>>, vector<1x4x8x32xbf16>
    %60 = vector.shape_cast %59 : vector<1x4x8x32xbf16> to vector<4x8x32xbf16>
    %c0_36 = arith.constant 0 : index
    %c0_37 = arith.constant 0 : index
    %c0_38 = arith.constant 0 : index
    %61 = vector.load %arg9[%c0_36, %c0_37, %c0_38] : memref<1x1x32xf32, #tpu.memory_space<vmem>>, vector<1x1x32xf32>
    %62 = vector.shape_cast %61 : vector<1x1x32xf32> to vector<1x32xf32>
    %63 = vector.extract_strided_slice %58 {offsets = [0, 0, 0], sizes = [1, 5, 8], strides = [1, 1, 1]} : vector<4x5x8xf32> to vector<1x5x8xf32>
    %64 = vector.shape_cast %63 : vector<1x5x8xf32> to vector<5x8xf32>
    %65 = arith.truncf %64 : vector<5x8xf32> to vector<5x8xbf16>
    %66 = vector.extract_strided_slice %60 {offsets = [0, 0, 0], sizes = [1, 8, 32], strides = [1, 1, 1]} : vector<4x8x32xbf16> to vector<1x8x32xbf16>
    %67 = vector.shape_cast %66 : vector<1x8x32xbf16> to vector<8x32xbf16>
    %cst_39 = arith.constant dense<0.000000e+00> : vector<5x32xf32>
    %68 = tpu.matmul %65, %67, %cst_39 {dimension_numbers = #tpu.dot_dimension_numbers<[1], [0], [0], [1], [0, 0, 1, 1], [], []>} : vector<5x8xbf16>, vector<8x32xbf16>, vector<5x32xf32> -> vector<5x32xf32>
    %69 = vector.broadcast %62 : vector<1x32xf32> to vector<5x32xf32>
    %70 = arith.addf %69, %68 : vector<5x32xf32>
    %71 = vector.extract_strided_slice %58 {offsets = [1, 0, 0], sizes = [1, 5, 8], strides = [1, 1, 1]} : vector<4x5x8xf32> to vector<1x5x8xf32>
    %72 = vector.shape_cast %71 : vector<1x5x8xf32> to vector<5x8xf32>
    %73 = arith.truncf %72 : vector<5x8xf32> to vector<5x8xbf16>
    %74 = vector.extract_strided_slice %60 {offsets = [1, 0, 0], sizes = [1, 8, 32], strides = [1, 1, 1]} : vector<4x8x32xbf16> to vector<1x8x32xbf16>
    %75 = vector.shape_cast %74 : vector<1x8x32xbf16> to vector<8x32xbf16>
    %cst_40 = arith.constant dense<0.000000e+00> : vector<5x32xf32>
    %76 = tpu.matmul %73, %75, %cst_40 {dimension_numbers = #tpu.dot_dimension_numbers<[1], [0], [0], [1], [0, 0, 1, 1], [], []>} : vector<5x8xbf16>, vector<8x32xbf16>, vector<5x32xf32> -> vector<5x32xf32>
    %77 = arith.addf %70, %76 : vector<5x32xf32>
    %78 = vector.extract_strided_slice %58 {offsets = [2, 0, 0], sizes = [1, 5, 8], strides = [1, 1, 1]} : vector<4x5x8xf32> to vector<1x5x8xf32>
    %79 = vector.shape_cast %78 : vector<1x5x8xf32> to vector<5x8xf32>
    %80 = arith.truncf %79 : vector<5x8xf32> to vector<5x8xbf16>
    %81 = vector.extract_strided_slice %60 {offsets = [2, 0, 0], sizes = [1, 8, 32], strides = [1, 1, 1]} : vector<4x8x32xbf16> to vector<1x8x32xbf16>
    %82 = vector.shape_cast %81 : vector<1x8x32xbf16> to vector<8x32xbf16>
    %cst_41 = arith.constant dense<0.000000e+00> : vector<5x32xf32>
    %83 = tpu.matmul %80, %82, %cst_41 {dimension_numbers = #tpu.dot_dimension_numbers<[1], [0], [0], [1], [0, 0, 1, 1], [], []>} : vector<5x8xbf16>, vector<8x32xbf16>, vector<5x32xf32> -> vector<5x32xf32>
    %84 = arith.addf %77, %83 : vector<5x32xf32>
    %85 = vector.extract_strided_slice %58 {offsets = [3, 0, 0], sizes = [1, 5, 8], strides = [1, 1, 1]} : vector<4x5x8xf32> to vector<1x5x8xf32>
    %86 = vector.shape_cast %85 : vector<1x5x8xf32> to vector<5x8xf32>
    %87 = arith.truncf %86 : vector<5x8xf32> to vector<5x8xbf16>
    %88 = vector.extract_strided_slice %60 {offsets = [3, 0, 0], sizes = [1, 8, 32], strides = [1, 1, 1]} : vector<4x8x32xbf16> to vector<1x8x32xbf16>
    %89 = vector.shape_cast %88 : vector<1x8x32xbf16> to vector<8x32xbf16>
    %cst_42 = arith.constant dense<0.000000e+00> : vector<5x32xf32>
    %90 = tpu.matmul %87, %89, %cst_42 {dimension_numbers = #tpu.dot_dimension_numbers<[1], [0], [0], [1], [0, 0, 1, 1], [], []>} : vector<5x8xbf16>, vector<8x32xbf16>, vector<5x32xf32> -> vector<5x32xf32>
    %91 = arith.addf %84, %90 : vector<5x32xf32>
    %92 = arith.addf %3, %91 : vector<5x32xf32>
    %c0_43 = arith.constant 0 : index
    %c0_44 = arith.constant 0 : index
    %c0_45 = arith.constant 0 : index
    %93 = vector.load %arg10[%c0_43, %c0_44, %c0_45] : memref<1x1x32xf32, #tpu.memory_space<vmem>>, vector<1x1x32xf32>
    %94 = vector.shape_cast %93 : vector<1x1x32xf32> to vector<1x32xf32>
    %c0_46 = arith.constant 0 : index
    %c0_47 = arith.constant 0 : index
    %c0_48 = arith.constant 0 : index
    %95 = vector.load %arg11[%c0_46, %c0_47, %c0_48] : memref<1x1x32xf32, #tpu.memory_space<vmem>>, vector<1x1x32xf32>
    %96 = vector.shape_cast %95 : vector<1x1x32xf32> to vector<1x32xf32>
    %cst_49 = arith.constant dense<0.000000e+00> : vector<5xf32>
    %97 = vector.multi_reduction <add>, %92, %cst_49 [1] : vector<5x32xf32> to vector<5xf32>
    %98 = vector.shape_cast %97 : vector<5xf32> to vector<5x1xf32>
    %cst_50 = arith.constant 3.200000e+01 : f32
    %99 = vector.broadcast %cst_50 : f32 to vector<5x1xf32>
    %100 = arith.divf %98, %99 : vector<5x1xf32>
    %101 = vector.broadcast %100 : vector<5x1xf32> to vector<5x32xf32>
    %102 = arith.subf %92, %101 : vector<5x32xf32>
    %103 = arith.mulf %102, %102 : vector<5x32xf32>
    %cst_51 = arith.constant dense<0.000000e+00> : vector<5xf32>
    %104 = vector.multi_reduction <add>, %103, %cst_51 [1] : vector<5x32xf32> to vector<5xf32>
    %105 = vector.shape_cast %104 : vector<5xf32> to vector<5x1xf32>
    %cst_52 = arith.constant 3.200000e+01 : f32
    %106 = vector.broadcast %cst_52 : f32 to vector<5x1xf32>
    %107 = arith.divf %105, %106 : vector<5x1xf32>
    %cst_53 = arith.constant 9.99999974E-6 : f32
    %108 = vector.broadcast %cst_53 : f32 to vector<5x1xf32>
    %109 = arith.addf %107, %108 : vector<5x1xf32>
    %110 = math.rsqrt %109 : vector<5x1xf32>
    %111 = vector.broadcast %110 : vector<5x1xf32> to vector<5x32xf32>
    %112 = arith.mulf %102, %111 : vector<5x32xf32>
    %113 = vector.broadcast %94 : vector<1x32xf32> to vector<5x32xf32>
    %114 = arith.mulf %112, %113 : vector<5x32xf32>
    %115 = vector.broadcast %96 : vector<1x32xf32> to vector<5x32xf32>
    %116 = arith.addf %114, %115 : vector<5x32xf32>
    %117 = arith.truncf %116 : vector<5x32xf32> to vector<5x32xbf16>
    %c0_54 = arith.constant 0 : index
    %c0_55 = arith.constant 0 : index
    %c0_56 = arith.constant 0 : index
    %118 = vector.load %arg12[%c0_54, %c0_55, %c0_56] : memref<1x32x64xbf16, #tpu.memory_space<vmem>>, vector<1x32x64xbf16>
    %119 = vector.shape_cast %118 : vector<1x32x64xbf16> to vector<32x64xbf16>
    %cst_57 = arith.constant dense<0.000000e+00> : vector<5x64xf32>
    %120 = tpu.matmul %117, %119, %cst_57 {dimension_numbers = #tpu.dot_dimension_numbers<[1], [0], [0], [1], [0, 0, 1, 1], [], []>} : vector<5x32xbf16>, vector<32x64xbf16>, vector<5x64xf32> -> vector<5x64xf32>
    %c0_58 = arith.constant 0 : index
    %c0_59 = arith.constant 0 : index
    %c0_60 = arith.constant 0 : index
    %121 = vector.load %arg13[%c0_58, %c0_59, %c0_60] : memref<1x1x64xf32, #tpu.memory_space<vmem>>, vector<1x1x64xf32>
    %122 = vector.shape_cast %121 : vector<1x1x64xf32> to vector<1x64xf32>
    %123 = vector.broadcast %122 : vector<1x64xf32> to vector<5x64xf32>
    %124 = arith.addf %120, %123 : vector<5x64xf32>
    %cst_61 = arith.constant 5.000000e-01 : f32
    %125 = vector.broadcast %cst_61 : f32 to vector<5x64xf32>
    %126 = arith.mulf %125, %124 : vector<5x64xf32>
    %cst_62 = arith.constant 4.471500e-02 : f32
    %127 = vector.broadcast %cst_62 : f32 to vector<5x64xf32>
    %128 = arith.mulf %127, %124 : vector<5x64xf32>
    %129 = arith.mulf %128, %124 : vector<5x64xf32>
    %130 = arith.mulf %129, %124 : vector<5x64xf32>
    %131 = arith.addf %124, %130 : vector<5x64xf32>
    %cst_63 = arith.constant 0.797884583 : f32
    %132 = vector.broadcast %cst_63 : f32 to vector<5x64xf32>
    %133 = arith.mulf %132, %131 : vector<5x64xf32>
    %134 = math.tanh %133 : vector<5x64xf32>
    %cst_64 = arith.constant 1.000000e+00 : f32
    %135 = vector.broadcast %cst_64 : f32 to vector<5x64xf32>
    %136 = arith.addf %135, %134 : vector<5x64xf32>
    %137 = arith.mulf %126, %136 : vector<5x64xf32>
    %138 = arith.truncf %137 : vector<5x64xf32> to vector<5x64xbf16>
    %c0_65 = arith.constant 0 : index
    %c0_66 = arith.constant 0 : index
    %c0_67 = arith.constant 0 : index
    %139 = vector.load %arg14[%c0_65, %c0_66, %c0_67] : memref<1x64x32xbf16, #tpu.memory_space<vmem>>, vector<1x64x32xbf16>
    %140 = vector.shape_cast %139 : vector<1x64x32xbf16> to vector<64x32xbf16>
    %cst_68 = arith.constant dense<0.000000e+00> : vector<5x32xf32>
    %141 = tpu.matmul %138, %140, %cst_68 {dimension_numbers = #tpu.dot_dimension_numbers<[1], [0], [0], [1], [0, 0, 1, 1], [], []>} : vector<5x64xbf16>, vector<64x32xbf16>, vector<5x32xf32> -> vector<5x32xf32>
    %c0_69 = arith.constant 0 : index
    %c0_70 = arith.constant 0 : index
    %c0_71 = arith.constant 0 : index
    %142 = vector.load %arg15[%c0_69, %c0_70, %c0_71] : memref<1x1x32xf32, #tpu.memory_space<vmem>>, vector<1x1x32xf32>
    %143 = vector.shape_cast %142 : vector<1x1x32xf32> to vector<1x32xf32>
    %144 = vector.broadcast %143 : vector<1x32xf32> to vector<5x32xf32>
    %145 = arith.addf %141, %144 : vector<5x32xf32>
    %146 = arith.addf %92, %145 : vector<5x32xf32>
    %c1_i32 = arith.constant 1 : i32
    %147 = arith.cmpi slt, %arg1, %c1_i32 : i32
    %148 = arith.extui %147 : i1 to i32
    %c0_i32_72 = arith.constant 0 : i32
    %149 = arith.cmpi ne, %148, %c0_i32_72 : i32
    scf.if %149 {
      %c0_75 = arith.constant 0 : index
      %c0_76 = arith.constant 0 : index
      %153 = vector.load %arg17[%c0_75, %c0_76] : memref<5x32xf32, #tpu.memory_space<vmem>>, vector<5x32xf32>
      tpu.vector_store %arg17[%c0_75, %c0_76], %146 {strides = array<i32>} : memref<5x32xf32, #tpu.memory_space<vmem>>, vector<5x32xf32>,
    } else {
    }
    %c1_i32_73 = arith.constant 1 : i32
    %150 = arith.cmpi eq, %arg1, %c1_i32_73 : i32
    %151 = arith.extui %150 : i1 to i32
    %c0_i32_74 = arith.constant 0 : i32
    %152 = arith.cmpi ne, %151, %c0_i32_74 : i32
    scf.if %152 {
      %c0_75 = arith.constant 0 : index
      %c0_76 = arith.constant 0 : index
      %c0_77 = arith.constant 0 : index
      %153 = vector.load %arg16[%c0_75, %c0_76, %c0_77] : memref<1x5x32xf32, #tpu.memory_space<vmem>>, vector<1x5x32xf32>
      %154 = vector.shape_cast %153 : vector<1x5x32xf32> to vector<5x32xf32>
      %155 = vector.shape_cast %146 : vector<5x32xf32> to vector<1x5x32xf32>
      tpu.vector_store %arg16[%c0_75, %c0_76, %c0_77], %155 {strides = array<i32>} : memref<1x5x32xf32, #tpu.memory_space<vmem>>, vector<1x5x32xf32>,
    } else {
    }
    return
  }
  func.func @transform_0(%arg0: i32, %arg1: i32) -> (i32, i32, i32) {
    %c0_i32 = arith.constant 0 : i32
    %c0_i32_0 = arith.constant 0 : i32
    %c0_i32_1 = arith.constant 0 : i32
    return %arg0, %c0_i32, %c0_i32_0 : i32, i32, i32
  }
  func.func @transform_1(%arg0: i32, %arg1: i32) -> (i32, i32, i32) {
    %c0_i32 = arith.constant 0 : i32
    %c0_i32_0 = arith.constant 0 : i32
    %c0_i32_1 = arith.constant 0 : i32
    return %arg1, %c0_i32, %c0_i32_0 : i32, i32, i32
  }
  func.func @transform_2(%arg0: i32, %arg1: i32) -> (i32, i32, i32) {
    %c0_i32 = arith.constant 0 : i32
    %c0_i32_0 = arith.constant 0 : i32
    %c0_i32_1 = arith.constant 0 : i32
    return %arg1, %c0_i32, %c0_i32_0 : i32, i32, i32
  }
  func.func @transform_3(%arg0: i32, %arg1: i32) -> (i32, i32, i32, i32) {
    %c0_i32 = arith.constant 0 : i32
    %c0_i32_0 = arith.constant 0 : i32
    %c0_i32_1 = arith.constant 0 : i32
    %c0_i32_2 = arith.constant 0 : i32
    return %arg1, %c0_i32, %c0_i32_0, %c0_i32_1 : i32, i32, i32, i32
  }
  func.func @transform_4(%arg0: i32, %arg1: i32) -> (i32, i32, i32, i32) {
    %c0_i32 = arith.constant 0 : i32
    %c0_i32_0 = arith.constant 0 : i32
    %c0_i32_1 = arith.constant 0 : i32
    %c0_i32_2 = arith.constant 0 : i32
    return %arg1, %c0_i32, %c0_i32_0, %c0_i32_1 : i32, i32, i32, i32
  }
  func.func @transform_5(%arg0: i32, %arg1: i32) -> (i32, i32, i32, i32) {
    %c0_i32 = arith.constant 0 : i32
    %c0_i32_0 = arith.constant 0 : i32
    %c0_i32_1 = arith.constant 0 : i32
    %c0_i32_2 = arith.constant 0 : i32
    return %arg1, %c0_i32, %c0_i32_0, %c0_i32_1 : i32, i32, i32, i32
  }
  func.func @transform_6(%arg0: i32, %arg1: i32) -> (i32, i32, i32, i32) {
    %c0_i32 = arith.constant 0 : i32
    %c0_i32_0 = arith.constant 0 : i32
    %c0_i32_1 = arith.constant 0 : i32
    %c0_i32_2 = arith.constant 0 : i32
    return %arg1, %c0_i32, %c0_i32_0, %c0_i32_1 : i32, i32, i32, i32
  }
  func.func @transform_7(%arg0: i32, %arg1: i32) -> (i32, i32, i32) {
    %c0_i32 = arith.constant 0 : i32
    %c0_i32_0 = arith.constant 0 : i32
    %c0_i32_1 = arith.constant 0 : i32
    return %arg1, %c0_i32, %c0_i32_0 : i32, i32, i32
  }
  func.func @transform_8(%arg0: i32, %arg1: i32) -> (i32, i32, i32) {
    %c0_i32 = arith.constant 0 : i32
    %c0_i32_0 = arith.constant 0 : i32
    %c0_i32_1 = arith.constant 0 : i32
    return %arg1, %c0_i32, %c0_i32_0 : i32, i32, i32
  }
  func.func @transform_9(%arg0: i32, %arg1: i32) -> (i32, i32, i32) {
    %c0_i32 = arith.constant 0 : i32
    %c0_i32_0 = arith.constant 0 : i32
    %c0_i32_1 = arith.constant 0 : i32
    return %arg1, %c0_i32, %c0_i32_0 : i32, i32, i32
  }
  func.func @transform_10(%arg0: i32, %arg1: i32) -> (i32, i32, i32) {
    %c0_i32 = arith.constant 0 : i32
    %c0_i32_0 = arith.constant 0 : i32
    %c0_i32_1 = arith.constant 0 : i32
    return %arg1, %c0_i32, %c0_i32_0 : i32, i32, i32
  }
  func.func @transform_11(%arg0: i32, %arg1: i32) -> (i32, i32, i32) {
    %c0_i32 = arith.constant 0 : i32
    %c0_i32_0 = arith.constant 0 : i32
    %c0_i32_1 = arith.constant 0 : i32
    return %arg1, %c0_i32, %c0_i32_0 : i32, i32, i32
  }
  func.func @transform_12(%arg0: i32, %arg1: i32) -> (i32, i32, i32) {
    %c0_i32 = arith.constant 0 : i32
    %c0_i32_0 = arith.constant 0 : i32
    %c0_i32_1 = arith.constant 0 : i32
    return %arg1, %c0_i32, %c0_i32_0 : i32, i32, i32
  }
  func.func @transform_13(%arg0: i32, %arg1: i32) -> (i32, i32, i32) {
    %c0_i32 = arith.constant 0 : i32
    %c0_i32_0 = arith.constant 0 : i32
    %c0_i32_1 = arith.constant 0 : i32
    return %arg1, %c0_i32, %c0_i32_0 : i32, i32, i32
  }
  func.func @transform_14(%arg0: i32, %arg1: i32) -> (i32, i32, i32) {
    %c0_i32 = arith.constant 0 : i32
    %c0_i32_0 = arith.constant 0 : i32
    %c0_i32_1 = arith.constant 0 : i32
    return %arg0, %c0_i32, %c0_i32_0 : i32, i32, i32
  }
}

</mosaic_0001>

<llo_original>
// kernel: cxr_transformer_forward.1
$region0: #{cxr_transformer_forward.1}
  #allocation0 [shape = 'u32[]', space=smem, size = 0x4, offset = 0x4, fixed_abs, tag = 'smem constant byte address 0x4 - core index']
  #allocation1 [shape = 'u32[72,128]{1,0:T(1,128)}', space=vmem, size = 0x9000, scoped, tag = 'internal scratch']
  #allocation2 [shape = 'f32[5,32]{1,0:T(8,128)}', space=vmem, size = 0x1000, scoped, tag = 'scratch operand']
  %s0 = inlined_call_operand.vmem [shape: f32[2,5,32], index: 0, kind: input, shape index: {}]
  %s1 = inlined_call_operand.vmem [shape: f32[2,1,32], index: 1, kind: input, shape index: {}]
  %s2 = inlined_call_operand.vmem [shape: f32[2,1,32], index: 2, kind: input, shape index: {}]
  %s3 = inlined_call_operand.vmem [shape: bf16[2,4,32,8], index: 3, kind: input, shape index: {}]
  %s4 = inlined_call_operand.vmem [shape: bf16[2,4,32,8], index: 4, kind: input, shape index: {}]
  %s5 = inlined_call_operand.vmem [shape: bf16[2,4,32,8], index: 5, kind: input, shape index: {}]
  %s6 = inlined_call_operand.vmem [shape: bf16[2,4,8,32], index: 6, kind: input, shape index: {}]
  %s7 = inlined_call_operand.vmem [shape: f32[2,1,32], index: 7, kind: input, shape index: {}]
  %s8 = inlined_call_operand.vmem [shape: f32[2,1,32], index: 8, kind: input, shape index: {}]
  %s9 = inlined_call_operand.vmem [shape: f32[2,1,32], index: 9, kind: input, shape index: {}]
  %s10 = inlined_call_operand.vmem [shape: bf16[2,32,64], index: 10, kind: input, shape index: {}]
  %s11 = inlined_call_operand.vmem [shape: f32[2,1,64], index: 11, kind: input, shape index: {}]
  %s12 = inlined_call_operand.vmem [shape: bf16[2,64,32], index: 12, kind: input, shape index: {}]
  %s13 = inlined_call_operand.vmem [shape: f32[2,1,32], index: 13, kind: input, shape index: {}]
  %s14 = inlined_call_operand.vmem [shape: f32[2,5,32], index: 14, kind: output, shape index: {}]
  %s15 = sld [smem:[#allocation0]]
  $region101: #{cxr_transformer_forward.1} parent=0
    _
  %s17 = ssub.s32 1, %s15
  %s18 = scalar_select 0, %s17, %s15
  loop: start=0, step=1, limit=6
  $region2: #{cxr_transformer_forward.1} parent=0 // loop_pre_header
    _
  $region3: #{cxr_transformer_forward.1} parent=0 // loop_header
    %s20 = sphi 0, %s24
    %p21 = scmp.ge.s32.totalorder %s20, 6
    %s27 = sphi 0, %s39
    %s28 = sphi 0, %s35
    %s29 = sphi 0, %s27
    %s30 = sphi 0, %s28
    %s31 = sphi 0, %s29
    %s32 = sphi 0, %s30
    %s42 = sphi 0, %s44
    %s45 = sphi 0, %s42
    %s46 = sphi 0, %s45
    %s62 = sphi 0, %s46
    %s68 = sphi 0, %s70
    %s71 = sphi 0, %s68
    %s72 = sphi 0, %s71
    %s88 = sphi 0, %s72
    %s94 = sphi 0, %s96
    %s97 = sphi 0, %s94
    %s98 = sphi 0, %s97
    %s114 = sphi 0, %s98
    %s120 = sphi 0, %s122
    %s123 = sphi 0, %s120
    %s124 = sphi 0, %s123
    %s140 = sphi 0, %s124
    %s146 = sphi 0, %s148
    %s149 = sphi 0, %s146
    %s150 = sphi 0, %s149
    %s166 = sphi 0, %s150
    %s172 = sphi 0, %s174
    %s175 = sphi 0, %s172
    %s176 = sphi 0, %s175
    %s192 = sphi 0, %s176
    %s198 = sphi 0, %s200
    %s201 = sphi 0, %s198
    %s202 = sphi 0, %s201
    %s218 = sphi 0, %s202
    %s224 = sphi 0, %s226
    %s227 = sphi 0, %s224
    %s228 = sphi 0, %s227
    %s244 = sphi 0, %s228
    %s250 = sphi 0, %s252
    %s253 = sphi 0, %s250
    %s254 = sphi 0, %s253
    %s270 = sphi 0, %s254
    %s276 = sphi 0, %s278
    %s279 = sphi 0, %s276
    %s280 = sphi 0, %s279
    %s296 = sphi 0, %s280
    %s302 = sphi 0, %s304
    %s305 = sphi 0, %s302
    %s306 = sphi 0, %s305
    %s322 = sphi 0, %s306
    %s328 = sphi 0, %s330
    %s331 = sphi 0, %s328
    %s332 = sphi 0, %s331
    %s348 = sphi 0, %s332
    %s354 = sphi 0, %s356
    %s357 = sphi 0, %s354
    %s358 = sphi 0, %s357
    %s374 = sphi 0, %s358
    %s380 = sphi 0, %s382
    %s383 = sphi 0, %s380
    %s384 = sphi 0, %s383
    %s400 = sphi 0, %s384
    %s406 = sphi 0, %s408
    %s409 = sphi 0, %s406
    %s410 = sphi 0, %s409
    %s426 = sphi 0, %s410
  $region4: #{cxr_transformer_forward.1} parent=0 // loop_header_branch
    %23 = sbr.rel (%p21) target = $region8
  $region5: #{cxr_transformer_forward.1} parent=0 // loop_body
    %s25 = ssub.s32 %s20, 1
    %s26 = ssub.s32 %s20, 2
    %s33 = sadd.s32 1, %s28
    %p34 = scmp.ge.s32.totalorder %s33, 2
    %s35 = scalar_select %p34, 0, %s33
    %s36 = sadd.s32 1, %s27
    %s37 = scalar_select %p34, %s36, %s27
    %p38 = scmp.ge.s32.totalorder %s37, 2
    %s39 = scalar_select %p38, 0, %s37
    %s40 = ssub.s32 %s27, %s39
    %p41 = scmp.eq.s32.totalorder %s40, 0
    %s43 = sadd.s32 %s42, 1
    %s44 = scalar_select %p41, %s42, %s43
    %p47 = pneg %p41
    %p48 = scmp.eq.s32.totalorder %s20, 3
    %p49 = por %p47, %p48
    %p50 = scmp.ne.s32.totalorder %s42, %s45
    %p51 = scmp.eq.s32.totalorder %s20, 0
    %p52 = por %p50, %p51
    %p53 = scmp.ne.s32.totalorder %s42, %s45
    %p54 = scmp.eq.s32.totalorder %s25, 3
    %p55 = por %p53, %p54
    %p56 = scmp.ne.s32.totalorder %s45, %s46
    %p57 = scmp.eq.s32.totalorder %s25, 0
    %p58 = por %p56, %p57
    %p59 = scmp.ne.s32.totalorder %s45, %s46
    %p60 = scmp.eq.s32.totalorder %s26, 3
    %p61 = por %p59, %p60
    %p63 = scmp.ne.s32.totalorder %s46, %s62
    %p64 = scmp.eq.s32.totalorder %s26, 0
    %p65 = por %p63, %p64
    %s66 = ssub.s32 %s28, %s35
    %p67 = scmp.eq.s32.totalorder %s66, 0
    %s69 = sadd.s32 %s68, 1
    %s70 = scalar_select %p67, %s68, %s69
    %p73 = pneg %p67
    %p74 = scmp.eq.s32.totalorder %s20, 3
    %p75 = por %p73, %p74
    %p76 = scmp.ne.s32.totalorder %s68, %s71
    %p77 = scmp.eq.s32.totalorder %s20, 0
    %p78 = por %p76, %p77
    %p79 = scmp.ne.s32.totalorder %s68, %s71
    %p80 = scmp.eq.s32.totalorder %s25, 3
    %p81 = por %p79, %p80
    %p82 = scmp.ne.s32.totalorder %s71, %s72
    %p83 = scmp.eq.s32.totalorder %s25, 0
    %p84 = por %p82, %p83
    %p85 = scmp.ne.s32.totalorder %s71, %s72
    %p86 = scmp.eq.s32.totalorder %s26, 3
    %p87 = por %p85, %p86
    %p89 = scmp.ne.s32.totalorder %s72, %s88
    %p90 = scmp.eq.s32.totalorder %s26, 0
    %p91 = por %p89, %p90
    %s92 = ssub.s32 %s28, %s35
    %p93 = scmp.eq.s32.totalorder %s92, 0
    %s95 = sadd.s32 %s94, 1
    %s96 = scalar_select %p93, %s94, %s95
    %p99 = pneg %p93
    %p100 = scmp.eq.s32.totalorder %s20, 3
    %p101 = por %p99, %p100
    %p102 = scmp.ne.s32.totalorder %s94, %s97
    %p103 = scmp.eq.s32.totalorder %s20, 0
    %p104 = por %p102, %p103
    %p105 = scmp.ne.s32.totalorder %s94, %s97
    %p106 = scmp.eq.s32.totalorder %s25, 3
    %p107 = por %p105, %p106
    %p108 = scmp.ne.s32.totalorder %s97, %s98
    %p109 = scmp.eq.s32.totalorder %s25, 0
    %p110 = por %p108, %p109
    %p111 = scmp.ne.s32.totalorder %s97, %s98
    %p112 = scmp.eq.s32.totalorder %s26, 3
    %p113 = por %p111, %p112
    %p115 = scmp.ne.s32.totalorder %s98, %s114
    %p116 = scmp.eq.s32.totalorder %s26, 0
    %p117 = por %p115, %p116
    %s118 = ssub.s32 %s28, %s35
    %p119 = scmp.eq.s32.totalorder %s118, 0
    %s121 = sadd.s32 %s120, 1
    %s122 = scalar_select %p119, %s120, %s121
    %p125 = pneg %p119
    %p126 = scmp.eq.s32.totalorder %s20, 3
    %p127 = por %p125, %p126
    %p128 = scmp.ne.s32.totalorder %s120, %s123
    %p129 = scmp.eq.s32.totalorder %s20, 0
    %p130 = por %p128, %p129
    %p131 = scmp.ne.s32.totalorder %s120, %s123
    %p132 = scmp.eq.s32.totalorder %s25, 3
    %p133 = por %p131, %p132
    %p134 = scmp.ne.s32.totalorder %s123, %s124
    %p135 = scmp.eq.s32.totalorder %s25, 0
    %p136 = por %p134, %p135
    %p137 = scmp.ne.s32.totalorder %s123, %s124
    %p138 = scmp.eq.s32.totalorder %s26, 3
    %p139 = por %p137, %p138
    %p141 = scmp.ne.s32.totalorder %s124, %s140
    %p142 = scmp.eq.s32.totalorder %s26, 0
    %p143 = por %p141, %p142
    %s144 = ssub.s32 %s28, %s35
    %p145 = scmp.eq.s32.totalorder %s144, 0
    %s147 = sadd.s32 %s146, 1
    %s148 = scalar_select %p145, %s146, %s147
    %p151 = pneg %p145
    %p152 = scmp.eq.s32.totalorder %s20, 3
    %p153 = por %p151, %p152
    %p154 = scmp.ne.s32.totalorder %s146, %s149
    %p155 = scmp.eq.s32.totalorder %s20, 0
    %p156 = por %p154, %p155
    %p157 = scmp.ne.s32.totalorder %s146, %s149
    %p158 = scmp.eq.s32.totalorder %s25, 3
    %p159 = por %p157, %p158
    %p160 = scmp.ne.s32.totalorder %s149, %s150
    %p161 = scmp.eq.s32.totalorder %s25, 0
    %p162 = por %p160, %p161
    %p163 = scmp.ne.s32.totalorder %s149, %s150
    %p164 = scmp.eq.s32.totalorder %s26, 3
    %p165 = por %p163, %p164
    %p167 = scmp.ne.s32.totalorder %s150, %s166
    %p168 = scmp.eq.s32.totalorder %s26, 0
    %p169 = por %p167, %p168
    %s170 = ssub.s32 %s28, %s35
    %p171 = scmp.eq.s32.totalorder %s170, 0
    %s173 = sadd.s32 %s172, 1
    %s174 = scalar_select %p171, %s172, %s173
    %p177 = pneg %p171
    %p178 = scmp.eq.s32.totalorder %s20, 3
    %p179 = por %p177, %p178
    %p180 = scmp.ne.s32.totalorder %s172, %s175
    %p181 = scmp.eq.s32.totalorder %s20, 0
    %p182 = por %p180, %p181
    %p183 = scmp.ne.s32.totalorder %s172, %s175
    %p184 = scmp.eq.s32.totalorder %s25, 3
    %p185 = por %p183, %p184
    %p186 = scmp.ne.s32.totalorder %s175, %s176
    %p187 = scmp.eq.s32.totalorder %s25, 0
    %p188 = por %p186, %p187
    %p189 = scmp.ne.s32.totalorder %s175, %s176
    %p190 = scmp.eq.s32.totalorder %s26, 3
    %p191 = por %p189, %p190
    %p193 = scmp.ne.s32.totalorder %s176, %s192
    %p194 = scmp.eq.s32.totalorder %s26, 0
    %p195 = por %p193, %p194
    %s196 = ssub.s32 %s28, %s35
    %p197 = scmp.eq.s32.totalorder %s196, 0
    %s199 = sadd.s32 %s198, 1
    %s200 = scalar_select %p197, %s198, %s199
    %p203 = pneg %p197
    %p204 = scmp.eq.s32.totalorder %s20, 3
    %p205 = por %p203, %p204
    %p206 = scmp.ne.s32.totalorder %s198, %s201
    %p207 = scmp.eq.s32.totalorder %s20, 0
    %p208 = por %p206, %p207
    %p209 = scmp.ne.s32.totalorder %s198, %s201
    %p210 = scmp.eq.s32.totalorder %s25, 3
    %p211 = por %p209, %p210
    %p212 = scmp.ne.s32.totalorder %s201, %s202
    %p213 = scmp.eq.s32.totalorder %s25, 0
    %p214 = por %p212, %p213
    %p215 = scmp.ne.s32.totalorder %s201, %s202
    %p216 = scmp.eq.s32.totalorder %s26, 3
    %p217 = por %p215, %p216
    %p219 = scmp.ne.s32.totalorder %s202, %s218
    %p220 = scmp.eq.s32.totalorder %s26, 0
    %p221 = por %p219, %p220
    %s222 = ssub.s32 %s28, %s35
    %p223 = scmp.eq.s32.totalorder %s222, 0
    %s225 = sadd.s32 %s224, 1
    %s226 = scalar_select %p223, %s224, %s225
    %p229 = pneg %p223
    %p230 = scmp.eq.s32.totalorder %s20, 3
    %p231 = por %p229, %p230
    %p232 = scmp.ne.s32.totalorder %s224, %s227
    %p233 = scmp.eq.s32.totalorder %s20, 0
    %p234 = por %p232, %p233
    %p235 = scmp.ne.s32.totalorder %s224, %s227
    %p236 = scmp.eq.s32.totalorder %s25, 3
    %p237 = por %p235, %p236
    %p238 = scmp.ne.s32.totalorder %s227, %s228
    %p239 = scmp.eq.s32.totalorder %s25, 0
    %p240 = por %p238, %p239
    %p241 = scmp.ne.s32.totalorder %s227, %s228
    %p242 = scmp.eq.s32.totalorder %s26, 3
    %p243 = por %p241, %p242
    %p245 = scmp.ne.s32.totalorder %s228, %s244
    %p246 = scmp.eq.s32.totalorder %s26, 0
    %p247 = por %p245, %p246
    %s248 = ssub.s32 %s28, %s35
    %p249 = scmp.eq.s32.totalorder %s248, 0
    %s251 = sadd.s32 %s250, 1
    %s252 = scalar_select %p249, %s250, %s251
    %p255 = pneg %p249
    %p256 = scmp.eq.s32.totalorder %s20, 3
    %p257 = por %p255, %p256
    %p258 = scmp.ne.s32.totalorder %s250, %s253
    %p259 = scmp.eq.s32.totalorder %s20, 0
    %p260 = por %p258, %p259
    %p261 = scmp.ne.s32.totalorder %s250, %s253
    %p262 = scmp.eq.s32.totalorder %s25, 3
    %p263 = por %p261, %p262
    %p264 = scmp.ne.s32.totalorder %s253, %s254
    %p265 = scmp.eq.s32.totalorder %s25, 0
    %p266 = por %p264, %p265
    %p267 = scmp.ne.s32.totalorder %s253, %s254
    %p268 = scmp.eq.s32.totalorder %s26, 3
    %p269 = por %p267, %p268
    %p271 = scmp.ne.s32.totalorder %s254, %s270
    %p272 = scmp.eq.s32.totalorder %s26, 0
    %p273 = por %p271, %p272
    %s274 = ssub.s32 %s28, %s35
    %p275 = scmp.eq.s32.totalorder %s274, 0
    %s277 = sadd.s32 %s276, 1
    %s278 = scalar_select %p275, %s276, %s277
    %p281 = pneg %p275
    %p282 = scmp.eq.s32.totalorder %s20, 3
    %p283 = por %p281, %p282
    %p284 = scmp.ne.s32.totalorder %s276, %s279
    %p285 = scmp.eq.s32.totalorder %s20, 0
    %p286 = por %p284, %p285
    %p287 = scmp.ne.s32.totalorder %s276, %s279
    %p288 = scmp.eq.s32.totalorder %s25, 3
    %p289 = por %p287, %p288
    %p290 = scmp.ne.s32.totalorder %s279, %s280
    %p291 = scmp.eq.s32.totalorder %s25, 0
    %p292 = por %p290, %p291
    %p293 = scmp.ne.s32.totalorder %s279, %s280
    %p294 = scmp.eq.s32.totalorder %s26, 3
    %p295 = por %p293, %p294
    %p297 = scmp.ne.s32.totalorder %s280, %s296
    %p298 = scmp.eq.s32.totalorder %s26, 0
    %p299 = por %p297, %p298
    %s300 = ssub.s32 %s28, %s35
    %p301 = scmp.eq.s32.totalorder %s300, 0
    %s303 = sadd.s32 %s302, 1
    %s304 = scalar_select %p301, %s302, %s303
    %p307 = pneg %p301
    %p308 = scmp.eq.s32.totalorder %s20, 3
    %p309 = por %p307, %p308
    %p310 = scmp.ne.s32.totalorder %s302, %s305
    %p311 = scmp.eq.s32.totalorder %s20, 0
    %p312 = por %p310, %p311
    %p313 = scmp.ne.s32.totalorder %s302, %s305
    %p314 = scmp.eq.s32.totalorder %s25, 3
    %p315 = por %p313, %p314
    %p316 = scmp.ne.s32.totalorder %s305, %s306
    %p317 = scmp.eq.s32.totalorder %s25, 0
    %p318 = por %p316, %p317
    %p319 = scmp.ne.s32.totalorder %s305, %s306
    %p320 = scmp.eq.s32.totalorder %s26, 3
    %p321 = por %p319, %p320
    %p323 = scmp.ne.s32.totalorder %s306, %s322
    %p324 = scmp.eq.s32.totalorder %s26, 0
    %p325 = por %p323, %p324
    %s326 = ssub.s32 %s28, %s35
    %p327 = scmp.eq.s32.totalorder %s326, 0
    %s329 = sadd.s32 %s328, 1
    %s330 = scalar_select %p327, %s328, %s329
    %p333 = pneg %p327
    %p334 = scmp.eq.s32.totalorder %s20, 3
    %p335 = por %p333, %p334
    %p336 = scmp.ne.s32.totalorder %s328, %s331
    %p337 = scmp.eq.s32.totalorder %s20, 0
    %p338 = por %p336, %p337
    %p339 = scmp.ne.s32.totalorder %s328, %s331
    %p340 = scmp.eq.s32.totalorder %s25, 3
    %p341 = por %p339, %p340
    %p342 = scmp.ne.s32.totalorder %s331, %s332
    %p343 = scmp.eq.s32.totalorder %s25, 0
    %p344 = por %p342, %p343
    %p345 = scmp.ne.s32.totalorder %s331, %s332
    %p346 = scmp.eq.s32.totalorder %s26, 3
    %p347 = por %p345, %p346
    %p349 = scmp.ne.s32.totalorder %s332, %s348
    %p350 = scmp.eq.s32.totalorder %s26, 0
    %p351 = por %p349, %p350
    %s352 = ssub.s32 %s28, %s35
    %p353 = scmp.eq.s32.totalorder %s352, 0
    %s355 = sadd.s32 %s354, 1
    %s356 = scalar_select %p353, %s354, %s355
    %p359 = pneg %p353
    %p360 = scmp.eq.s32.totalorder %s20, 3
    %p361 = por %p359, %p360
    %p362 = scmp.ne.s32.totalorder %s354, %s357
    %p363 = scmp.eq.s32.totalorder %s20, 0
    %p364 = por %p362, %p363
    %p365 = scmp.ne.s32.totalorder %s354, %s357
    %p366 = scmp.eq.s32.totalorder %s25, 3
    %p367 = por %p365, %p366
    %p368 = scmp.ne.s32.totalorder %s357, %s358
    %p369 = scmp.eq.s32.totalorder %s25, 0
    %p370 = por %p368, %p369
    %p371 = scmp.ne.s32.totalorder %s357, %s358
    %p372 = scmp.eq.s32.totalorder %s26, 3
    %p373 = por %p371, %p372
    %p375 = scmp.ne.s32.totalorder %s358, %s374
    %p376 = scmp.eq.s32.totalorder %s26, 0
    %p377 = por %p375, %p376
    %s378 = ssub.s32 %s28, %s35
    %p379 = scmp.eq.s32.totalorder %s378, 0
    %s381 = sadd.s32 %s380, 1
    %s382 = scalar_select %p379, %s380, %s381
    %p385 = pneg %p379
    %p386 = scmp.eq.s32.totalorder %s20, 3
    %p387 = por %p385, %p386
    %p388 = scmp.ne.s32.totalorder %s380, %s383
    %p389 = scmp.eq.s32.totalorder %s20, 0
    %p390 = por %p388, %p389
    %p391 = scmp.ne.s32.totalorder %s380, %s383
    %p392 = scmp.eq.s32.totalorder %s25, 3
    %p393 = por %p391, %p392
    %p394 = scmp.ne.s32.totalorder %s383, %s384
    %p395 = scmp.eq.s32.totalorder %s25, 0
    %p396 = por %p394, %p395
    %p397 = scmp.ne.s32.totalorder %s383, %s384
    %p398 = scmp.eq.s32.totalorder %s26, 3
    %p399 = por %p397, %p398
    %p401 = scmp.ne.s32.totalorder %s384, %s400
    %p402 = scmp.eq.s32.totalorder %s26, 0
    %p403 = por %p401, %p402
    %s404 = ssub.s32 %s27, %s39
    %p405 = scmp.eq.s32.totalorder %s404, 0
    %s407 = sadd.s32 %s406, 1
    %s408 = scalar_select %p405, %s406, %s407
    %p411 = pneg %p405
    %p412 = scmp.eq.s32.totalorder %s20, 3
    %p413 = por %p411, %p412
    %p414 = scmp.ne.s32.totalorder %s406, %s409
    %p415 = scmp.eq.s32.totalorder %s20, 0
    %p416 = por %p414, %p415
    %p417 = scmp.ne.s32.totalorder %s406, %s409
    %p418 = scmp.eq.s32.totalorder %s25, 3
    %p419 = por %p417, %p418
    %p420 = scmp.ne.s32.totalorder %s409, %s410
    %p421 = scmp.eq.s32.totalorder %s25, 0
    %p422 = por %p420, %p421
    %p423 = scmp.ne.s32.totalorder %s409, %s410
    %p424 = scmp.eq.s32.totalorder %s26, 3
    %p425 = por %p423, %p424
    %p427 = scmp.ne.s32.totalorder %s410, %s426
    %p428 = scmp.eq.s32.totalorder %s26, 0
    %p429 = por %p427, %p428
    %p430 = scmp.le.s32.totalorder 1, %s20
    %p431 = scmp.lt.s32.totalorder %s20, 5
    %p432 = pnand %p430, %p431
    %p433 = pneg %p432
    // Predicated region
    $region9: #{cxr_transformer_forward.1} parent=5 // pred_check
      _
    $region10: #{cxr_transformer_forward.1} parent=5 // pred_check_branch
      %435 = sbr.rel (%p432) target = $region12
    $region11: #{cxr_transformer_forward.1} parent=5 // pred_region
      %s436 = ssub.s32 %s20, 1
    $region12: #{cxr_transformer_forward.1} parent=5 // pred_fallthru
      _
    %p437 = scmp.lt.s32.totalorder %s20, 4
    // Predicated region
    $region13: #{cxr_transformer_forward.1} parent=5 // pred_check
      %p438 = pneg %p437
    $region14: #{cxr_transformer_forward.1} parent=5 // pred_check_branch
      %440 = sbr.rel (%p438) target = $region16
    $region15: #{cxr_transformer_forward.1} parent=5 // pred_region
      // Predicated region
      $region17: #{cxr_transformer_forward.1} parent=15 // pred_check
        %p441 = pneg %p52
      $region18: #{cxr_transformer_forward.1} parent=15 // pred_check_branch
        %443 = sbr.rel (%p441) target = $region20
      $region19: #{cxr_transformer_forward.1} parent=15 // pred_region
        %p444 = scmp.lt.s32.totalorder %s27, 1
        %s445 = scalar_select %p444, %s27, 1
        %s446 = smul.addr %s445, 8
        %s447 = scalar_lea.vmem %s0, %s446
      $region20: #{cxr_transformer_forward.1} parent=15 // pred_fallthru
        _
      // Predicated region
      $region21: #{cxr_transformer_forward.1} parent=15 // pred_check
        %p448 = pneg %p78
      $region22: #{cxr_transformer_forward.1} parent=15 // pred_check_branch
        %450 = sbr.rel (%p448) target = $region24
      $region23: #{cxr_transformer_forward.1} parent=15 // pred_region
        %p451 = scmp.lt.s32.totalorder %s28, 1
        %s452 = scalar_select %p451, %s28, 1
        %s453 = scalar_lea.vmem %s1, %s452
      $region24: #{cxr_transformer_forward.1} parent=15 // pred_fallthru
        _
      // Predicated region
      $region25: #{cxr_transformer_forward.1} parent=15 // pred_check
        %p454 = pneg %p104
      $region26: #{cxr_transformer_forward.1} parent=15 // pred_check_branch
        %456 = sbr.rel (%p454) target = $region28
      $region27: #{cxr_transformer_forward.1} parent=15 // pred_region
        %p457 = scmp.lt.s32.totalorder %s28, 1
        %s458 = scalar_select %p457, %s28, 1
        %s459 = scalar_lea.vmem %s2, %s458
      $region28: #{cxr_transformer_forward.1} parent=15 // pred_fallthru
        _
      // Predicated region
      $region29: #{cxr_transformer_forward.1} parent=15 // pred_check
        %p460 = pneg %p130
      $region30: #{cxr_transformer_forward.1} parent=15 // pred_check_branch
        %462 = sbr.rel (%p460) target = $region32
      $region31: #{cxr_transformer_forward.1} parent=15 // pred_region
        %p463 = scmp.lt.s32.totalorder %s28, 1
        %s464 = scalar_select %p463, %s28, 1
        %s465 = smul.addr %s464, 16
        %s466 = smul.addr %s465, 4
        %s467 = scalar_lea.vmem %s3, %s466
      $region32: #{cxr_transformer_forward.1} parent=15 // pred_fallthru
        _
      // Predicated region
      $region33: #{cxr_transformer_forward.1} parent=15 // pred_check
        %p468 = pneg %p156
      $region34: #{cxr_transformer_forward.1} parent=15 // pred_check_branch
        %470 = sbr.rel (%p468) target = $region36
      $region35: #{cxr_transformer_forward.1} parent=15 // pred_region
        %p471 = scmp.lt.s32.totalorder %s28, 1
        %s472 = scalar_select %p471, %s28, 1
        %s473 = smul.addr %s472, 16
        %s474 = smul.addr %s473, 4
        %s475 = scalar_lea.vmem %s4, %s474
      $region36: #{cxr_transformer_forward.1} parent=15 // pred_fallthru
        _
      // Predicated region
      $region37: #{cxr_transformer_forward.1} parent=15 // pred_check
        %p476 = pneg %p182
      $region38: #{cxr_transformer_forward.1} parent=15 // pred_check_branch
        %478 = sbr.rel (%p476) target = $region40
      $region39: #{cxr_transformer_forward.1} parent=15 // pred_region
        %p479 = scmp.lt.s32.totalorder %s28, 1
        %s480 = scalar_select %p479, %s28, 1
        %s481 = smul.addr %s480, 16
        %s482 = smul.addr %s481, 4
        %s483 = scalar_lea.vmem %s5, %s482
      $region40: #{cxr_transformer_forward.1} parent=15 // pred_fallthru
        _
      // Predicated region
      $region41: #{cxr_transformer_forward.1} parent=15 // pred_check
        %p484 = pneg %p208
      $region42: #{cxr_transformer_forward.1} parent=15 // pred_check_branch
        %486 = sbr.rel (%p484) target = $region44
      $region43: #{cxr_transformer_forward.1} parent=15 // pred_region
        %p487 = scmp.lt.s32.totalorder %s28, 1
        %s488 = scalar_select %p487, %s28, 1
        %s489 = smul.addr %s488, 4
        %s490 = smul.addr %s489, 4
        %s491 = scalar_lea.vmem %s6, %s490
      $region44: #{cxr_transformer_forward.1} parent=15 // pred_fallthru
        _
      // Predicated region
      $region45: #{cxr_transformer_forward.1} parent=15 // pred_check
        %p492 = pneg %p234
      $region46: #{cxr_transformer_forward.1} parent=15 // pred_check_branch
        %494 = sbr.rel (%p492) target = $region48
      $region47: #{cxr_transformer_forward.1} parent=15 // pred_region
        %p495 = scmp.lt.s32.totalorder %s28, 1
        %s496 = scalar_select %p495, %s28, 1
        %s497 = scalar_lea.vmem %s7, %s496
      $region48: #{cxr_transformer_forward.1} parent=15 // pred_fallthru
        _
      // Predicated region
      $region49: #{cxr_transformer_forward.1} parent=15 // pred_check
        %p498 = pneg %p260
      $region50: #{cxr_transformer_forward.1} parent=15 // pred_check_branch
        %500 = sbr.rel (%p498) target = $region52
      $region51: #{cxr_transformer_forward.1} parent=15 // pred_region
        %p501 = scmp.lt.s32.totalorder %s28, 1
        %s502 = scalar_select %p501, %s28, 1
        %s503 = scalar_lea.vmem %s8, %s502
      $region52: #{cxr_transformer_forward.1} parent=15 // pred_fallthru
        _
      // Predicated region
      $region53: #{cxr_transformer_forward.1} parent=15 // pred_check
        %p504 = pneg %p286
      $region54: #{cxr_transformer_forward.1} parent=15 // pred_check_branch
        %506 = sbr.rel (%p504) target = $region56
      $region55: #{cxr_transformer_forward.1} parent=15 // pred_region
        %p507 = scmp.lt.s32.totalorder %s28, 1
        %s508 = scalar_select %p507, %s28, 1
        %s509 = scalar_lea.vmem %s9, %s508
      $region56: #{cxr_transformer_forward.1} parent=15 // pred_fallthru
        _
      // Predicated region
      $region57: #{cxr_transformer_forward.1} parent=15 // pred_check
        %p510 = pneg %p312
      $region58: #{cxr_transformer_forward.1} parent=15 // pred_check_branch
        %512 = sbr.rel (%p510) target = $region60
      $region59: #{cxr_transformer_forward.1} parent=15 // pred_region
        %p513 = scmp.lt.s32.totalorder %s28, 1
        %s514 = scalar_select %p513, %s28, 1
        %s515 = smul.addr %s514, 4
        %s516 = smul.addr %s515, 4
        %s517 = scalar_lea.vmem %s10, %s516
      $region60: #{cxr_transformer_forward.1} parent=15 // pred_fallthru
        _
      // Predicated region
      $region61: #{cxr_transformer_forward.1} parent=15 // pred_check
        %p518 = pneg %p338
      $region62: #{cxr_transformer_forward.1} parent=15 // pred_check_branch
        %520 = sbr.rel (%p518) target = $region64
      $region63: #{cxr_transformer_forward.1} parent=15 // pred_region
        %p521 = scmp.lt.s32.totalorder %s28, 1
        %s522 = scalar_select %p521, %s28, 1
        %s523 = scalar_lea.vmem %s11, %s522
      $region64: #{cxr_transformer_forward.1} parent=15 // pred_fallthru
        _
      // Predicated region
      $region65: #{cxr_transformer_forward.1} parent=15 // pred_check
        %p524 = pneg %p364
      $region66: #{cxr_transformer_forward.1} parent=15 // pred_check_branch
        %526 = sbr.rel (%p524) target = $region68
      $region67: #{cxr_transformer_forward.1} parent=15 // pred_region
        %p527 = scmp.lt.s32.totalorder %s28, 1
        %s528 = scalar_select %p527, %s28, 1
        %s529 = smul.addr %s528, 8
        %s530 = smul.addr %s529, 4
        %s531 = scalar_lea.vmem %s12, %s530
      $region68: #{cxr_transformer_forward.1} parent=15 // pred_fallthru
        _
      // Predicated region
      $region69: #{cxr_transformer_forward.1} parent=15 // pred_check
        %p532 = pneg %p390
      $region70: #{cxr_transformer_forward.1} parent=15 // pred_check_branch
        %534 = sbr.rel (%p532) target = $region72
      $region71: #{cxr_transformer_forward.1} parent=15 // pred_region
        %p535 = scmp.lt.s32.totalorder %s28, 1
        %s536 = scalar_select %p535, %s28, 1
        %s537 = scalar_lea.vmem %s13, %s536
      $region72: #{cxr_transformer_forward.1} parent=15 // pred_fallthru
        _
    $region16: #{cxr_transformer_forward.1} parent=5 // pred_fallthru
      _
    %p538 = scmp.le.s32.totalorder 1, %s20
    %p539 = scmp.lt.s32.totalorder %s20, 5
    %p540 = pnand %p538, %p539
    %p541 = pneg %p540
    // Predicated region
    $region73: #{cxr_transformer_forward.1} parent=5 // pred_check
      _
    $region74: #{cxr_transformer_forward.1} parent=5 // pred_check_branch
      %543 = sbr.rel (%p540) target = $region76
    $region75: #{cxr_transformer_forward.1} parent=5 // pred_region
      %s544 = ssub.s32 %s20, 1
      %p545 = scmp.lt.s32.totalorder %s29, 1
      %s546 = scalar_select %p545, %s29, 1
      %s547 = smul.addr %s546, 8
      %s548 = scalar_lea.vmem %s0, %s547
      %p549 = pneg %p58
      %p550 = pneg %p55
      %p551 = scmp.lt.s32.totalorder %s30, 1
      %s552 = scalar_select %p551, %s30, 1
      %s553 = scalar_lea.vmem %s1, %s552
      %p554 = pneg %p84
      %p555 = pneg %p81
      %p556 = scmp.lt.s32.totalorder %s30, 1
      %s557 = scalar_select %p556, %s30, 1
      %s558 = scalar_lea.vmem %s2, %s557
      %p559 = pneg %p110
      %p560 = pneg %p107
      %p561 = scmp.lt.s32.totalorder %s30, 1
      %s562 = scalar_select %p561, %s30, 1
      %s563 = smul.addr %s562, 16
      %s564 = smul.addr %s563, 4
      %s565 = scalar_lea.vmem %s3, %s564
      %p566 = pneg %p136
      %p567 = pneg %p133
      %p568 = scmp.lt.s32.totalorder %s30, 1
      %s569 = scalar_select %p568, %s30, 1
      %s570 = smul.addr %s569, 16
      %s571 = smul.addr %s570, 4
      %s572 = scalar_lea.vmem %s4, %s571
      %p573 = pneg %p162
      %p574 = pneg %p159
      %p575 = scmp.lt.s32.totalorder %s30, 1
      %s576 = scalar_select %p575, %s30, 1
      %s577 = smul.addr %s576, 16
      %s578 = smul.addr %s577, 4
      %s579 = scalar_lea.vmem %s5, %s578
      %p580 = pneg %p188
      %p581 = pneg %p185
      %p582 = scmp.lt.s32.totalorder %s30, 1
      %s583 = scalar_select %p582, %s30, 1
      %s584 = smul.addr %s583, 4
      %s585 = smul.addr %s584, 4
      %s586 = scalar_lea.vmem %s6, %s585
      %p587 = pneg %p214
      %p588 = pneg %p211
      %p589 = scmp.lt.s32.totalorder %s30, 1
      %s590 = scalar_select %p589, %s30, 1
      %s591 = scalar_lea.vmem %s7, %s590
      %p592 = pneg %p240
      %p593 = pneg %p237
      %p594 = scmp.lt.s32.totalorder %s30, 1
      %s595 = scalar_select %p594, %s30, 1
      %s596 = scalar_lea.vmem %s8, %s595
      %p597 = pneg %p266
      %p598 = pneg %p263
      %p599 = scmp.lt.s32.totalorder %s30, 1
      %s600 = scalar_select %p599, %s30, 1
      %s601 = scalar_lea.vmem %s9, %s600
      %p602 = pneg %p292
      %p603 = pneg %p289
      %p604 = scmp.lt.s32.totalorder %s30, 1
      %s605 = scalar_select %p604, %s30, 1
      %s606 = smul.addr %s605, 4
      %s607 = smul.addr %s606, 4
      %s608 = scalar_lea.vmem %s10, %s607
      %p609 = pneg %p318
      %p610 = pneg %p315
      %p611 = scmp.lt.s32.totalorder %s30, 1
      %s612 = scalar_select %p611, %s30, 1
      %s613 = scalar_lea.vmem %s11, %s612
      %p614 = pneg %p344
      %p615 = pneg %p341
      %p616 = scmp.lt.s32.totalorder %s30, 1
      %s617 = scalar_select %p616, %s30, 1
      %s618 = smul.addr %s617, 8
      %s619 = smul.addr %s618, 4
      %s620 = scalar_lea.vmem %s12, %s619
      %p621 = pneg %p370
      %p622 = pneg %p367
      %p623 = scmp.lt.s32.totalorder %s30, 1
      %s624 = scalar_select %p623, %s30, 1
      %s625 = scalar_lea.vmem %s13, %s624
      %p626 = pneg %p396
      %p627 = pneg %p393
      %p628 = pneg %p422
      %p629 = pneg %p419
      %p630 = scmp.lt.s32.totalorder %s29, 1
      %s631 = scalar_select %p630, %s29, 1
      %s632 = smul.addr %s631, 8
      %s633 = scalar_lea.vmem %s14, %s632
      %p634 = scmp.lt.s32.totalorder %s29, 1
      %s635 = scalar_select %p634, %s29, 1
      %s636 = smul.addr %s635, 8
      %s637 = scalar_lea.vmem %s0, %s636
      %p638 = scmp.lt.s32.totalorder %s30, 1
      %s639 = scalar_select %p638, %s30, 1
      %s640 = scalar_lea.vmem %s1, %s639
      %p641 = scmp.lt.s32.totalorder %s30, 1
      %s642 = scalar_select %p641, %s30, 1
      %s643 = scalar_lea.vmem %s2, %s642
      %p644 = scmp.lt.s32.totalorder %s30, 1
      %s645 = scalar_select %p644, %s30, 1
      %s646 = smul.addr %s645, 16
      %s647 = smul.addr %s646, 4
      %s648 = scalar_lea.vmem %s3, %s647
      %p649 = scmp.lt.s32.totalorder %s30, 1
      %s650 = scalar_select %p649, %s30, 1
      %s651 = smul.addr %s650, 16
      %s652 = smul.addr %s651, 4
      %s653 = scalar_lea.vmem %s4, %s652
      %p654 = scmp.lt.s32.totalorder %s30, 1
      %s655 = scalar_select %p654, %s30, 1
      %s656 = smul.addr %s655, 16
      %s657 = smul.addr %s656, 4
      %s658 = scalar_lea.vmem %s5, %s657
      %p659 = scmp.lt.s32.totalorder %s30, 1
      %s660 = scalar_select %p659, %s30, 1
      %s661 = smul.addr %s660, 4
      %s662 = smul.addr %s661, 4
      %s663 = scalar_lea.vmem %s6, %s662
      %p664 = scmp.lt.s32.totalorder %s30, 1
      %s665 = scalar_select %p664, %s30, 1
      %s666 = scalar_lea.vmem %s7, %s665
      %p667 = scmp.lt.s32.totalorder %s30, 1
      %s668 = scalar_select %p667, %s30, 1
      %s669 = scalar_lea.vmem %s8, %s668
      %p670 = scmp.lt.s32.totalorder %s30, 1
      %s671 = scalar_select %p670, %s30, 1
      %s672 = scalar_lea.vmem %s9, %s671
      %p673 = scmp.lt.s32.totalorder %s30, 1
      %s674 = scalar_select %p673, %s30, 1
      %s675 = smul.addr %s674, 4
      %s676 = smul.addr %s675, 4
      %s677 = scalar_lea.vmem %s10, %s676
      %p678 = scmp.lt.s32.totalorder %s30, 1
      %s679 = scalar_select %p678, %s30, 1
      %s680 = scalar_lea.vmem %s11, %s679
      %p681 = scmp.lt.s32.totalorder %s30, 1
      %s682 = scalar_select %p681, %s30, 1
      %s683 = smul.addr %s682, 8
      %s684 = smul.addr %s683, 4
      %s685 = scalar_lea.vmem %s12, %s684
      %p686 = scmp.lt.s32.totalorder %s30, 1
      %s687 = scalar_select %p686, %s30, 1
      %s688 = scalar_lea.vmem %s13, %s687
      %p689 = scmp.lt.s32.totalorder %s29, 1
      %s690 = scalar_select %p689, %s29, 1
      %s691 = smul.addr %s690, 8
      %s692 = scalar_lea.vmem %s14, %s691
      %p694 = scmp.eq.s32.totalorder %s30, 0
      // Predicated region
      $region77: #{cxr_transformer_forward.1} parent=75 // pred_check
        %p695 = pneg %p694
      $region78: #{cxr_transformer_forward.1} parent=75 // pred_check_branch
        %697 = sbr.rel (%p695) target = $region80
      $region79: #{cxr_transformer_forward.1} parent=75 // pred_region
        %v698 = vld [vmem:[%s637] sm:$0x1f]
        %vm699 = vcmask 258048
        %700 = vst.msk [vmem:[#allocation2] sm:$0x1f] %vm699, %v698
      $region80: #{cxr_transformer_forward.1} parent=75 // pred_fallthru
        _
      %v701 = vld [vmem:[#allocation2] sm:$0x1f]
      %v702 = vld [vmem:[%s640] sm:$0x1]
      %v703 = vld [vmem:[%s643] sm:$0x1]
      %vm704 = vcmask 258048
      %v705 = vsel %vm704, %v701, 0.0
      %706 = vadd.xlane.f32.xlu0 %v705
      %v707 = vpop.xlane.xlu0 %706
      %v708 = vrcp.pop 32.0
      %v709 = vmul.f32 32.0, %v708
      %v710 = vsub.f32 1.0, %v709
      %v711 = vmul.f32 %v708, %v710
      %v712 = vadd.f32 %v708, %v711
      %vm713 = vweird.f32 %v708
      %v714 = vsel %vm713, %v708, %v712
      %v715 = vmul.f32 %v707, %v714
      %v716 = vsub.f32 %v701, %v715
      %v717 = vmul.f32 %v716, %v716
      %v718 = vsel %vm704, %v717, 0.0
      %719 = vadd.xlane.f32.xlu0 %v718
      %v720 = vpop.xlane.xlu0 %719
      %v721 = vmul.f32 %v720, %v714
      %v722 = vadd.f32 %v721, 1e-05
      %v723 = vrsqrt.pop %v722
      %v724 = vmul.f32 %v723, %v722
      %v725 = vmul.f32 %v724, %v723
      %v726 = vmul.f32 0.5, %v725
      %v727 = vsub.f32 1.5, %v726
      %v728 = vmul.f32 %v723, %v727
      %vm729 = vweird.f32 %v722
      %vm730 = vweird.f32 %v723
      %vm731 = vmor %vm729, %vm730
      %v732 = vsel %vm731, %v723, %v728
      %v733 = vmul.f32 %v716, %v732
      %v735 = vperm.slane %v702, 0
      %v737 = vmul.f32 %v733, %v735
      %v739 = vperm.slane %v703, 0
      %v741 = vadd.f32 %v737, %v739
      %v742 = vpack.c.bf16 %v741, %v741
      %v743 = vld [vmem:[%s648] sm:$0xf]
      %v744 = vld [vmem:[%s648 + $0x4] sm:$0xf]
      %v745 = vld [vmem:[%s648 + $0x8] sm:$0xf]
      %v746 = vld [vmem:[%s648 + $0xc] sm:$0xf]
      %v747 = vld [vmem:[%s648 + $0x10] sm:$0xf]
      %v748 = vld [vmem:[%s648 + $0x14] sm:$0xf]
      %v749 = vld [vmem:[%s648 + $0x18] sm:$0xf]
      %v750 = vld [vmem:[%s648 + $0x1c] sm:$0xf]
      %v751 = vld [vmem:[%s648 + $0x20] sm:$0xf]
      %v752 = vld [vmem:[%s648 + $0x24] sm:$0xf]
      %v753 = vld [vmem:[%s648 + $0x28] sm:$0xf]
      %v754 = vld [vmem:[%s648 + $0x2c] sm:$0xf]
      %v755 = vld [vmem:[%s648 + $0x30] sm:$0xf]
      %v756 = vld [vmem:[%s648 + $0x34] sm:$0xf]
      %v757 = vld [vmem:[%s648 + $0x38] sm:$0xf]
      %v758 = vld [vmem:[%s648 + $0x3c] sm:$0xf]
      %v763 = vunpack.c.l.b16 %v743
      %v764 = vunpack.c.l.b16 %v744
      %v765 = vunpack.c.l.b16 %v745
      %v766 = vunpack.c.l.b16 %v746
      %v767 = vpack.c.b16 %v764, %v763
      %v768 = vpack.c.b16 %v766, %v765
      %vm771 = vcmask 261120
      %v773 = vsel %vm771, %v742, 0
      %775 = vmatpush.bf16.msra.mxu0 0
      %776 = vmatpush.bf16.msra.mxu0 0
      %777 = vmatpush.bf16.msra.mxu0 0
      %778 = vmatpush.bf16.msra.mxu0 0
      %779 = vmatpush.bf16.msra.mxu0 0
      %780 = vmatpush.bf16.msra.mxu0 0
      %781 = vmatpush.bf16.msra.mxu0 %v768
      %782 = vmatpush.bf16.msra.mxu0 %v767
      %783 = vmatmul.bf16.gmra.mxu0 %v773
      %v784 = vpop.f32.mrf.mxu0
      %v785 = vadd.f32 0.0, %v784
      %v786 = vpop.f32.mrf.mxu0
      %787 = vdwg.mxu0
      %v792 = vunpack.c.l.b16 %v747
      %v793 = vunpack.c.l.b16 %v748
      %v794 = vunpack.c.l.b16 %v749
      %v795 = vunpack.c.l.b16 %v750
      %v796 = vpack.c.b16 %v793, %v792
      %v797 = vpack.c.b16 %v795, %v794
      %800 = vmatpush.bf16.msra.mxu0 0
      %801 = vmatpush.bf16.msra.mxu0 0
      %802 = vmatpush.bf16.msra.mxu0 0
      %803 = vmatpush.bf16.msra.mxu0 0
      %804 = vmatpush.bf16.msra.mxu0 0
      %805 = vmatpush.bf16.msra.mxu0 0
      %806 = vmatpush.bf16.msra.mxu0 %v797
      %807 = vmatpush.bf16.msra.mxu0 %v796
      %808 = vmatmul.bf16.gmra.mxu0 %v773
      %v809 = vpop.f32.mrf.mxu0
      %v810 = vadd.f32 0.0, %v809
      %v811 = vpop.f32.mrf.mxu0
      %812 = vdwg.mxu0
      %v817 = vunpack.c.l.b16 %v751
      %v818 = vunpack.c.l.b16 %v752
      %v819 = vunpack.c.l.b16 %v753
      %v820 = vunpack.c.l.b16 %v754
      %v821 = vpack.c.b16 %v818, %v817
      %v822 = vpack.c.b16 %v820, %v819
      %825 = vmatpush.bf16.msra.mxu0 0
      %826 = vmatpush.bf16.msra.mxu0 0
      %827 = vmatpush.bf16.msra.mxu0 0
      %828 = vmatpush.bf16.msra.mxu0 0
      %829 = vmatpush.bf16.msra.mxu0 0
      %830 = vmatpush.bf16.msra.mxu0 0
      %831 = vmatpush.bf16.msra.mxu0 %v822
      %832 = vmatpush.bf16.msra.mxu0 %v821
      %833 = vmatmul.bf16.gmra.mxu0 %v773
      %v834 = vpop.f32.mrf.mxu0
      %v835 = vadd.f32 0.0, %v834
      %v836 = vpop.f32.mrf.mxu0
      %837 = vdwg.mxu0
      %v842 = vunpack.c.l.b16 %v755
      %v843 = vunpack.c.l.b16 %v756
      %v844 = vunpack.c.l.b16 %v757
      %v845 = vunpack.c.l.b16 %v758
      %v846 = vpack.c.b16 %v843, %v842
      %v847 = vpack.c.b16 %v845, %v844
      %850 = vmatpush.bf16.msra.mxu0 0
      %851 = vmatpush.bf16.msra.mxu0 0
      %852 = vmatpush.bf16.msra.mxu0 0
      %853 = vmatpush.bf16.msra.mxu0 0
      %854 = vmatpush.bf16.msra.mxu0 0
      %855 = vmatpush.bf16.msra.mxu0 0
      %856 = vmatpush.bf16.msra.mxu0 %v847
      %857 = vmatpush.bf16.msra.mxu0 %v846
      %858 = vmatmul.bf16.gmra.mxu0 %v773
      %v859 = vpop.f32.mrf.mxu0
      %v860 = vadd.f32 0.0, %v859
      %v861 = vpop.f32.mrf.mxu0
      %862 = vdwg.mxu0
      %v863 = vld [vmem:[%s653] sm:$0xf]
      %v864 = vld [vmem:[%s653 + $0x4] sm:$0xf]
      %v865 = vld [vmem:[%s653 + $0x8] sm:$0xf]
      %v866 = vld [vmem:[%s653 + $0xc] sm:$0xf]
      %v867 = vld [vmem:[%s653 + $0x10] sm:$0xf]
      %v868 = vld [vmem:[%s653 + $0x14] sm:$0xf]
      %v869 = vld [vmem:[%s653 + $0x18] sm:$0xf]
      %v870 = vld [vmem:[%s653 + $0x1c] sm:$0xf]
      %v871 = vld [vmem:[%s653 + $0x20] sm:$0xf]
      %v872 = vld [vmem:[%s653 + $0x24] sm:$0xf]
      %v873 = vld [vmem:[%s653 + $0x28] sm:$0xf]
      %v874 = vld [vmem:[%s653 + $0x2c] sm:$0xf]
      %v875 = vld [vmem:[%s653 + $0x30] sm:$0xf]
      %v876 = vld [vmem:[%s653 + $0x34] sm:$0xf]
      %v877 = vld [vmem:[%s653 + $0x38] sm:$0xf]
      %v878 = vld [vmem:[%s653 + $0x3c] sm:$0xf]
      %v883 = vunpack.c.l.b16 %v863
      %v884 = vunpack.c.l.b16 %v864
      %v885 = vunpack.c.l.b16 %v865
      %v886 = vunpack.c.l.b16 %v866
      %v887 = vpack.c.b16 %v884, %v883
      %v888 = vpack.c.b16 %v886, %v885
      %891 = vmatpush.bf16.msra.mxu0 0
      %892 = vmatpush.bf16.msra.mxu0 0
      %893 = vmatpush.bf16.msra.mxu0 0
      %894 = vmatpush.bf16.msra.mxu0 0
      %895 = vmatpush.bf16.msra.mxu0 0
      %896 = vmatpush.bf16.msra.mxu0 0
      %897 = vmatpush.bf16.msra.mxu0 %v888
      %898 = vmatpush.bf16.msra.mxu0 %v887
      %899 = vmatmul.bf16.gmra.mxu0 %v773
      %v900 = vpop.f32.mrf.mxu0
      %v901 = vadd.f32 0.0, %v900
      %v902 = vpop.f32.mrf.mxu0
      %903 = vdwg.mxu0
      %v908 = vunpack.c.l.b16 %v867
      %v909 = vunpack.c.l.b16 %v868
      %v910 = vunpack.c.l.b16 %v869
      %v911 = vunpack.c.l.b16 %v870
      %v912 = vpack.c.b16 %v909, %v908
      %v913 = vpack.c.b16 %v911, %v910
      %916 = vmatpush.bf16.msra.mxu0 0
      %917 = vmatpush.bf16.msra.mxu0 0
      %918 = vmatpush.bf16.msra.mxu0 0
      %919 = vmatpush.bf16.msra.mxu0 0
      %920 = vmatpush.bf16.msra.mxu0 0
      %921 = vmatpush.bf16.msra.mxu0 0
      %922 = vmatpush.bf16.msra.mxu0 %v913
      %923 = vmatpush.bf16.msra.mxu0 %v912
      %924 = vmatmul.bf16.gmra.mxu0 %v773
      %v925 = vpop.f32.mrf.mxu0
      %v926 = vadd.f32 0.0, %v925
      %v927 = vpop.f32.mrf.mxu0
      %928 = vdwg.mxu0
      %v933 = vunpack.c.l.b16 %v871
      %v934 = vunpack.c.l.b16 %v872
      %v935 = vunpack.c.l.b16 %v873
      %v936 = vunpack.c.l.b16 %v874
      %v937 = vpack.c.b16 %v934, %v933
      %v938 = vpack.c.b16 %v936, %v935
      %941 = vmatpush.bf16.msra.mxu0 0
      %942 = vmatpush.bf16.msra.mxu0 0
      %943 = vmatpush.bf16.msra.mxu0 0
      %944 = vmatpush.bf16.msra.mxu0 0
      %945 = vmatpush.bf16.msra.mxu0 0
      %946 = vmatpush.bf16.msra.mxu0 0
      %947 = vmatpush.bf16.msra.mxu0 %v938
      %948 = vmatpush.bf16.msra.mxu0 %v937
      %949 = vmatmul.bf16.gmra.mxu0 %v773
      %v950 = vpop.f32.mrf.mxu0
      %v951 = vadd.f32 0.0, %v950
      %v952 = vpop.f32.mrf.mxu0
      %953 = vdwg.mxu0
      %v958 = vunpack.c.l.b16 %v875
      %v959 = vunpack.c.l.b16 %v876
      %v960 = vunpack.c.l.b16 %v877
      %v961 = vunpack.c.l.b16 %v878
      %v962 = vpack.c.b16 %v959, %v958
      %v963 = vpack.c.b16 %v961, %v960
      %966 = vmatpush.bf16.msra.mxu0 0
      %967 = vmatpush.bf16.msra.mxu0 0
      %968 = vmatpush.bf16.msra.mxu0 0
      %969 = vmatpush.bf16.msra.mxu0 0
      %970 = vmatpush.bf16.msra.mxu0 0
      %971 = vmatpush.bf16.msra.mxu0 0
      %972 = vmatpush.bf16.msra.mxu0 %v963
      %973 = vmatpush.bf16.msra.mxu0 %v962
      %974 = vmatmul.bf16.gmra.mxu0 %v773
      %v975 = vpop.f32.mrf.mxu0
      %v976 = vadd.f32 0.0, %v975
      %v977 = vpop.f32.mrf.mxu0
      %978 = vdwg.mxu0
      %v979 = vld [vmem:[%s658] sm:$0xf]
      %v980 = vld [vmem:[%s658 + $0x4] sm:$0xf]
      %v981 = vld [vmem:[%s658 + $0x8] sm:$0xf]
      %v982 = vld [vmem:[%s658 + $0xc] sm:$0xf]
      %v983 = vld [vmem:[%s658 + $0x10] sm:$0xf]
      %v984 = vld [vmem:[%s658 + $0x14] sm:$0xf]
      %v985 = vld [vmem:[%s658 + $0x18] sm:$0xf]
      %v986 = vld [vmem:[%s658 + $0x1c] sm:$0xf]
      %v987 = vld [vmem:[%s658 + $0x20] sm:$0xf]
      %v988 = vld [vmem:[%s658 + $0x24] sm:$0xf]
      %v989 = vld [vmem:[%s658 + $0x28] sm:$0xf]
      %v990 = vld [vmem:[%s658 + $0x2c] sm:$0xf]
      %v991 = vld [vmem:[%s658 + $0x30] sm:$0xf]
      %v992 = vld [vmem:[%s658 + $0x34] sm:$0xf]
      %v993 = vld [vmem:[%s658 + $0x38] sm:$0xf]
      %v994 = vld [vmem:[%s658 + $0x3c] sm:$0xf]
      %v999 = vunpack.c.l.b16 %v979
      %v1000 = vunpack.c.l.b16 %v980
      %v1001 = vunpack.c.l.b16 %v981
      %v1002 = vunpack.c.l.b16 %v982
      %v1003 = vpack.c.b16 %v1000, %v999
      %v1004 = vpack.c.b16 %v1002, %v1001
      %1007 = vmatpush.bf16.msra.mxu0 0
      %1008 = vmatpush.bf16.msra.mxu0 0
      %1009 = vmatpush.bf16.msra.mxu0 0
      %1010 = vmatpush.bf16.msra.mxu0 0
      %1011 = vmatpush.bf16.msra.mxu0 0
      %1012 = vmatpush.bf16.msra.mxu0 0
      %1013 = vmatpush.bf16.msra.mxu0 %v1004
      %1014 = vmatpush.bf16.msra.mxu0 %v1003
      %1015 = vmatmul.bf16.gmra.mxu0 %v773
      %v1016 = vpop.f32.mrf.mxu0
      %v1017 = vadd.f32 0.0, %v1016
      %v1018 = vpop.f32.mrf.mxu0
      %1019 = vdwg.mxu0
      %v1024 = vunpack.c.l.b16 %v983
      %v1025 = vunpack.c.l.b16 %v984
      %v1026 = vunpack.c.l.b16 %v985
      %v1027 = vunpack.c.l.b16 %v986
      %v1028 = vpack.c.b16 %v1025, %v1024
      %v1029 = vpack.c.b16 %v1027, %v1026
      %1032 = vmatpush.bf16.msra.mxu0 0
      %1033 = vmatpush.bf16.msra.mxu0 0
      %1034 = vmatpush.bf16.msra.mxu0 0
      %1035 = vmatpush.bf16.msra.mxu0 0
      %1036 = vmatpush.bf16.msra.mxu0 0
      %1037 = vmatpush.bf16.msra.mxu0 0
      %1038 = vmatpush.bf16.msra.mxu0 %v1029
      %1039 = vmatpush.bf16.msra.mxu0 %v1028
      %1040 = vmatmul.bf16.gmra.mxu0 %v773
      %v1041 = vpop.f32.mrf.mxu0
      %v1042 = vadd.f32 0.0, %v1041
      %v1043 = vpop.f32.mrf.mxu0
      %1044 = vdwg.mxu0
      %v1049 = vunpack.c.l.b16 %v987
      %v1050 = vunpack.c.l.b16 %v988
      %v1051 = vunpack.c.l.b16 %v989
      %v1052 = vunpack.c.l.b16 %v990
      %v1053 = vpack.c.b16 %v1050, %v1049
      %v1054 = vpack.c.b16 %v1052, %v1051
      %1057 = vmatpush.bf16.msra.mxu0 0
      %1058 = vmatpush.bf16.msra.mxu0 0
      %1059 = vmatpush.bf16.msra.mxu0 0
      %1060 = vmatpush.bf16.msra.mxu0 0
      %1061 = vmatpush.bf16.msra.mxu0 0
      %1062 = vmatpush.bf16.msra.mxu0 0
      %1063 = vmatpush.bf16.msra.mxu0 %v1054
      %1064 = vmatpush.bf16.msra.mxu0 %v1053
      %1065 = vmatmul.bf16.gmra.mxu0 %v773
      %v1066 = vpop.f32.mrf.mxu0
      %v1067 = vadd.f32 0.0, %v1066
      %v1068 = vpop.f32.mrf.mxu0
      %1069 = vdwg.mxu0
      %v1074 = vunpack.c.l.b16 %v991
      %v1075 = vunpack.c.l.b16 %v992
      %v1076 = vunpack.c.l.b16 %v993
      %v1077 = vunpack.c.l.b16 %v994
      %v1078 = vpack.c.b16 %v1075, %v1074
      %v1079 = vpack.c.b16 %v1077, %v1076
      %1082 = vmatpush.bf16.msra.mxu0 0
      %1083 = vmatpush.bf16.msra.mxu0 0
      %1084 = vmatpush.bf16.msra.mxu0 0
      %1085 = vmatpush.bf16.msra.mxu0 0
      %1086 = vmatpush.bf16.msra.mxu0 0
      %1087 = vmatpush.bf16.msra.mxu0 0
      %1088 = vmatpush.bf16.msra.mxu0 %v1079
      %1089 = vmatpush.bf16.msra.mxu0 %v1078
      %1090 = vmatmul.bf16.gmra.mxu0 %v773
      %v1091 = vpop.f32.mrf.mxu0
      %v1092 = vadd.f32 0.0, %v1091
      %v1093 = vpop.f32.mrf.mxu0
      %1094 = vdwg.mxu0
      %v1095 = vpack.c.bf16 %v785, %v785
      %v1096 = vpack.c.bf16 %v810, %v810
      %v1097 = vpack.c.bf16 %v835, %v835
      %v1098 = vpack.c.bf16 %v860, %v860
      %v1099 = vpack.c.bf16 %v901, %v901
      %v1100 = vpack.c.bf16 %v926, %v926
      %v1101 = vpack.c.bf16 %v951, %v951
      %v1102 = vpack.c.bf16 %v976, %v976
      %vm1103 = vcmask 64512
      %v1105 = vsel %vm1103, %v1095, 0
      %v1108 = vsel %vm1103, %v1099, 0
      %1110 = vmatpush.bf16.xpose.msra.mxu0 0
      %1111 = vmatpush.bf16.xpose.msra.mxu0 0
      %1112 = vmatpush.bf16.xpose.msra.mxu0 0
      %1113 = vmatpush.bf16.xpose.msra.mxu0 0
      %1114 = vmatpush.bf16.xpose.msra.mxu0 0
      %1115 = vmatpush.bf16.xpose.msra.mxu0 0
      %1116 = vmatpush.bf16.xpose.msra.mxu0 0
      %1117 = vmatpush.bf16.xpose.msra.mxu0 %v1108
      %1118 = vmatmul.bf16.gmra.mxu0 %v1105
      %v1119 = vpop.f32.mrf.mxu0
      %v1120 = vadd.f32 0.0, %v1119
      %v1121 = vpop.f32.mrf.mxu0
      %1122 = vdwg.mxu0
      %v1124 = vsel %vm1103, %v1096, 0
      %v1127 = vsel %vm1103, %v1100, 0
      %1129 = vmatpush.bf16.xpose.msra.mxu0 0
      %1130 = vmatpush.bf16.xpose.msra.mxu0 0
      %1131 = vmatpush.bf16.xpose.msra.mxu0 0
      %1132 = vmatpush.bf16.xpose.msra.mxu0 0
      %1133 = vmatpush.bf16.xpose.msra.mxu0 0
      %1134 = vmatpush.bf16.xpose.msra.mxu0 0
      %1135 = vmatpush.bf16.xpose.msra.mxu0 0
      %1136 = vmatpush.bf16.xpose.msra.mxu0 %v1127
      %1137 = vmatmul.bf16.gmra.mxu0 %v1124
      %v1138 = vpop.f32.mrf.mxu0
      %v1139 = vadd.f32 0.0, %v1138
      %v1140 = vpop.f32.mrf.mxu0
      %1141 = vdwg.mxu0
      %v1143 = vsel %vm1103, %v1097, 0
      %v1146 = vsel %vm1103, %v1101, 0
      %1148 = vmatpush.bf16.xpose.msra.mxu0 0
      %1149 = vmatpush.bf16.xpose.msra.mxu0 0
      %1150 = vmatpush.bf16.xpose.msra.mxu0 0
      %1151 = vmatpush.bf16.xpose.msra.mxu0 0
      %1152 = vmatpush.bf16.xpose.msra.mxu0 0
      %1153 = vmatpush.bf16.xpose.msra.mxu0 0
      %1154 = vmatpush.bf16.xpose.msra.mxu0 0
      %1155 = vmatpush.bf16.xpose.msra.mxu0 %v1146
      %1156 = vmatmul.bf16.gmra.mxu0 %v1143
      %v1157 = vpop.f32.mrf.mxu0
      %v1158 = vadd.f32 0.0, %v1157
      %v1159 = vpop.f32.mrf.mxu0
      %1160 = vdwg.mxu0
      %v1162 = vsel %vm1103, %v1098, 0
      %v1165 = vsel %vm1103, %v1102, 0
      %1167 = vmatpush.bf16.xpose.msra.mxu0 0
      %1168 = vmatpush.bf16.xpose.msra.mxu0 0
      %1169 = vmatpush.bf16.xpose.msra.mxu0 0
      %1170 = vmatpush.bf16.xpose.msra.mxu0 0
      %1171 = vmatpush.bf16.xpose.msra.mxu0 0
      %1172 = vmatpush.bf16.xpose.msra.mxu0 0
      %1173 = vmatpush.bf16.xpose.msra.mxu0 0
      %1174 = vmatpush.bf16.xpose.msra.mxu0 %v1165
      %1175 = vmatmul.bf16.gmra.mxu0 %v1162
      %v1176 = vpop.f32.mrf.mxu0
      %v1177 = vadd.f32 0.0, %v1176
      %v1178 = vpop.f32.mrf.mxu0
      %1179 = vdwg.mxu0
      %v1180 = vmul.f32 %v1120, 0.35355338
      %v1181 = vmul.f32 %v1139, 0.35355338
      %v1182 = vmul.f32 %v1158, 0.35355338
      %v1183 = vmul.f32 %v1177, 0.35355338
      %vm1184 = vcmask 36864
      %v1185 = vsel %vm1184, %v1180, -inf
      %1186 = vmax.xlane.f32.xlu0 %v1185
      %v1187 = vpop.xlane.xlu0 %1186
      %v1188 = vsel %vm1184, %v1181, -inf
      %1189 = vmax.xlane.f32.xlu0 %v1188
      %v1190 = vpop.xlane.xlu0 %1189
      %v1191 = vsel %vm1184, %v1182, -inf
      %1192 = vmax.xlane.f32.xlu0 %v1191
      %v1193 = vpop.xlane.xlu0 %1192
      %v1194 = vsel %vm1184, %v1183, -inf
      %1195 = vmax.xlane.f32.xlu0 %v1194
      %v1196 = vpop.xlane.xlu0 %1195
      %v1197 = vsub.f32 %v1180, %v1187
      %v1198 = vsub.f32 %v1181, %v1190
      %v1199 = vsub.f32 %v1182, %v1193
      %v1200 = vsub.f32 %v1183, %v1196
      %v1201 = vmul.f32 %v1197, 1.442695
      %v1202 = vpow.pop %v1201
      %v1203 = vmul.f32 %v1198, 1.442695
      %v1204 = vpow.pop %v1203
      %v1205 = vmul.f32 %v1199, 1.442695
      %v1206 = vpow.pop %v1205
      %v1207 = vmul.f32 %v1200, 1.442695
      %v1208 = vpow.pop %v1207
      %v1209 = vsel %vm1184, %v1202, 0.0
      %1210 = vadd.xlane.f32.xlu0 %v1209
      %v1211 = vpop.xlane.xlu0 %1210
      %v1212 = vsel %vm1184, %v1204, 0.0
      %1213 = vadd.xlane.f32.xlu0 %v1212
      %v1214 = vpop.xlane.xlu0 %1213
      %v1215 = vsel %vm1184, %v1206, 0.0
      %1216 = vadd.xlane.f32.xlu0 %v1215
      %v1217 = vpop.xlane.xlu0 %1216
      %v1218 = vsel %vm1184, %v1208, 0.0
      %1219 = vadd.xlane.f32.xlu0 %v1218
      %v1220 = vpop.xlane.xlu0 %1219
      %v1221 = vrcp.pop %v1211
      %v1222 = vrcp.pop %v1214
      %v1223 = vrcp.pop %v1217
      %v1224 = vrcp.pop %v1220
      %v1225 = vmul.f32 %v1202, %v1221
      %v1226 = vmul.f32 %v1204, %v1222
      %v1227 = vmul.f32 %v1206, %v1223
      %v1228 = vmul.f32 %v1208, %v1224
      %v1229 = vpack.c.bf16 %v1225, %v1225
      %v1230 = vpack.c.bf16 %v1226, %v1226
      %v1231 = vpack.c.bf16 %v1227, %v1227
      %v1232 = vpack.c.bf16 %v1228, %v1228
      %v1233 = vpack.c.bf16 %v1017, %v1017
      %v1234 = vpack.c.bf16 %v1042, %v1042
      %v1235 = vpack.c.bf16 %v1067, %v1067
      %v1236 = vpack.c.bf16 %v1092, %v1092
      %vm1237 = vcmask 39936
      %v1239 = vsel %vm1237, %v1229, 0
      %vm1241 = vcmask 1041408
      %vm1242 = vcmask 1042432
      %v1243 = vsel %vm1241, 4294967295, 65535
      %v1244 = vsel %vm1242, %v1243, 0
      %v1246 = vand.u32 %v1233, %v1244
      %1248 = vmatpush.bf16.msra.mxu0 0
      %1249 = vmatpush.bf16.msra.mxu0 0
      %1250 = vmatpush.bf16.msra.mxu0 0
      %1251 = vmatpush.bf16.msra.mxu0 0
      %1252 = vmatpush.bf16.msra.mxu0 0
      %1253 = vmatpush.bf16.msra.mxu0 0
      %1254 = vmatpush.bf16.msra.mxu0 0
      %1255 = vmatpush.bf16.msra.mxu0 %v1246
      %1256 = vmatmul.bf16.gmra.mxu0 %v1239
      %v1257 = vpop.f32.mrf.mxu0
      %v1258 = vadd.f32 0.0, %v1257
      %v1259 = vpop.f32.mrf.mxu0
      %1260 = vdwg.mxu0
      %v1262 = vsel %vm1237, %v1230, 0
      %v1265 = vand.u32 %v1234, %v1244
      %1267 = vmatpush.bf16.msra.mxu0 0
      %1268 = vmatpush.bf16.msra.mxu0 0
      %1269 = vmatpush.bf16.msra.mxu0 0
      %1270 = vmatpush.bf16.msra.mxu0 0
      %1271 = vmatpush.bf16.msra.mxu0 0
      %1272 = vmatpush.bf16.msra.mxu0 0
      %1273 = vmatpush.bf16.msra.mxu0 0
      %1274 = vmatpush.bf16.msra.mxu0 %v1265
      %1275 = vmatmul.bf16.gmra.mxu0 %v1262
      %v1276 = vpop.f32.mrf.mxu0
      %v1277 = vadd.f32 0.0, %v1276
      %v1278 = vpop.f32.mrf.mxu0
      %1279 = vdwg.mxu0
      %v1281 = vsel %vm1237, %v1231, 0
      %v1284 = vand.u32 %v1235, %v1244
      %1286 = vmatpush.bf16.msra.mxu0 0
      %1287 = vmatpush.bf16.msra.mxu0 0
      %1288 = vmatpush.bf16.msra.mxu0 0
      %1289 = vmatpush.bf16.msra.mxu0 0
      %1290 = vmatpush.bf16.msra.mxu0 0
      %1291 = vmatpush.bf16.msra.mxu0 0
      %1292 = vmatpush.bf16.msra.mxu0 0
      %1293 = vmatpush.bf16.msra.mxu0 %v1284
      %1294 = vmatmul.bf16.gmra.mxu0 %v1281
      %v1295 = vpop.f32.mrf.mxu0
      %v1296 = vadd.f32 0.0, %v1295
      %v1297 = vpop.f32.mrf.mxu0
      %1298 = vdwg.mxu0
      %v1300 = vsel %vm1237, %v1232, 0
      %v1303 = vand.u32 %v1236, %v1244
      %1305 = vmatpush.bf16.msra.mxu0 0
      %1306 = vmatpush.bf16.msra.mxu0 0
      %1307 = vmatpush.bf16.msra.mxu0 0
      %1308 = vmatpush.bf16.msra.mxu0 0
      %1309 = vmatpush.bf16.msra.mxu0 0
      %1310 = vmatpush.bf16.msra.mxu0 0
      %1311 = vmatpush.bf16.msra.mxu0 0
      %1312 = vmatpush.bf16.msra.mxu0 %v1303
      %1313 = vmatmul.bf16.gmra.mxu0 %v1300
      %v1314 = vpop.f32.mrf.mxu0
      %v1315 = vadd.f32 0.0, %v1314
      %v1316 = vpop.f32.mrf.mxu0
      %1317 = vdwg.mxu0
      %v1318 = vld [vmem:[%s663] sm:$0xf]
      %v1319 = vld [vmem:[%s663 + $0x4] sm:$0xf]
      %v1320 = vld [vmem:[%s663 + $0x8] sm:$0xf]
      %v1321 = vld [vmem:[%s663 + $0xc] sm:$0xf]
      %v1322 = vld [vmem:[%s666] sm:$0x1]
      %v1323 = vpack.c.bf16 %v1258, %v1258
      %v1325 = vsel %vm1103, %v1323, 0
      %vm1327 = vcmask 1043456
      %v1329 = vsel %vm1327, %v1318, 0
      %1331 = vmatpush.bf16.msra.mxu0 0
      %1332 = vmatpush.bf16.msra.mxu0 0
      %1333 = vmatpush.bf16.msra.mxu0 0
      %1334 = vmatpush.bf16.msra.mxu0 0
      %1335 = vmatpush.bf16.msra.mxu0 0
      %1336 = vmatpush.bf16.msra.mxu0 0
      %1337 = vmatpush.bf16.msra.mxu0 0
      %1338 = vmatpush.bf16.msra.mxu0 %v1329
      %1339 = vmatmul.bf16.gmra.mxu0 %v1325
      %v1340 = vpop.f32.mrf.mxu0
      %v1341 = vadd.f32 0.0, %v1340
      %v1342 = vpop.f32.mrf.mxu0
      %1343 = vdwg.mxu0
      %v1345 = vperm.slane %v1322, 0
      %v1347 = vadd.f32 %v1345, %v1341
      %v1348 = vpack.c.bf16 %v1277, %v1277
      %v1350 = vsel %vm1103, %v1348, 0
      %v1353 = vsel %vm1327, %v1319, 0
      %1355 = vmatpush.bf16.msra.mxu0 0
      %1356 = vmatpush.bf16.msra.mxu0 0
      %1357 = vmatpush.bf16.msra.mxu0 0
      %1358 = vmatpush.bf16.msra.mxu0 0
      %1359 = vmatpush.bf16.msra.mxu0 0
      %1360 = vmatpush.bf16.msra.mxu0 0
      %1361 = vmatpush.bf16.msra.mxu0 0
      %1362 = vmatpush.bf16.msra.mxu0 %v1353
      %1363 = vmatmul.bf16.gmra.mxu0 %v1350
      %v1364 = vpop.f32.mrf.mxu0
      %v1365 = vadd.f32 0.0, %v1364
      %v1366 = vpop.f32.mrf.mxu0
      %1367 = vdwg.mxu0
      %v1368 = vadd.f32 %v1347, %v1365
      %v1369 = vpack.c.bf16 %v1296, %v1296
      %v1371 = vsel %vm1103, %v1369, 0
      %v1374 = vsel %vm1327, %v1320, 0
      %1376 = vmatpush.bf16.msra.mxu0 0
      %1377 = vmatpush.bf16.msra.mxu0 0
      %1378 = vmatpush.bf16.msra.mxu0 0
      %1379 = vmatpush.bf16.msra.mxu0 0
      %1380 = vmatpush.bf16.msra.mxu0 0
      %1381 = vmatpush.bf16.msra.mxu0 0
      %1382 = vmatpush.bf16.msra.mxu0 0
      %1383 = vmatpush.bf16.msra.mxu0 %v1374
      %1384 = vmatmul.bf16.gmra.mxu0 %v1371
      %v1385 = vpop.f32.mrf.mxu0
      %v1386 = vadd.f32 0.0, %v1385
      %v1387 = vpop.f32.mrf.mxu0
      %1388 = vdwg.mxu0
      %v1389 = vadd.f32 %v1368, %v1386
      %v1390 = vpack.c.bf16 %v1315, %v1315
      %v1392 = vsel %vm1103, %v1390, 0
      %v1395 = vsel %vm1327, %v1321, 0
      %1397 = vmatpush.bf16.msra.mxu0 0
      %1398 = vmatpush.bf16.msra.mxu0 0
      %1399 = vmatpush.bf16.msra.mxu0 0
      %1400 = vmatpush.bf16.msra.mxu0 0
      %1401 = vmatpush.bf16.msra.mxu0 0
      %1402 = vmatpush.bf16.msra.mxu0 0
      %1403 = vmatpush.bf16.msra.mxu0 0
      %1404 = vmatpush.bf16.msra.mxu0 %v1395
      %1405 = vmatmul.bf16.gmra.mxu0 %v1392
      %v1406 = vpop.f32.mrf.mxu0
      %v1407 = vadd.f32 0.0, %v1406
      %v1408 = vpop.f32.mrf.mxu0
      %1409 = vdwg.mxu0
      %v1410 = vadd.f32 %v1389, %v1407
      %v1411 = vadd.f32 %v701, %v1410
      %v1412 = vld [vmem:[%s669] sm:$0x1]
      %v1413 = vld [vmem:[%s672] sm:$0x1]
      %v1414 = vsel %vm704, %v1411, 0.0
      %1415 = vadd.xlane.f32.xlu0 %v1414
      %v1416 = vpop.xlane.xlu0 %1415
      %v1417 = vmul.f32 %v1416, %v714
      %v1418 = vsub.f32 %v1411, %v1417
      %v1419 = vmul.f32 %v1418, %v1418
      %v1420 = vsel %vm704, %v1419, 0.0
      %1421 = vadd.xlane.f32.xlu0 %v1420
      %v1422 = vpop.xlane.xlu0 %1421
      %v1423 = vmul.f32 %v1422, %v714
      %v1424 = vadd.f32 %v1423, 1e-05
      %v1425 = vrsqrt.pop %v1424
      %v1426 = vmul.f32 %v1425, %v1424
      %v1427 = vmul.f32 %v1426, %v1425
      %v1428 = vmul.f32 0.5, %v1427
      %v1429 = vsub.f32 1.5, %v1428
      %v1430 = vmul.f32 %v1425, %v1429
      %vm1431 = vweird.f32 %v1424
      %vm1432 = vweird.f32 %v1425
      %vm1433 = vmor %vm1431, %vm1432
      %v1434 = vsel %vm1433, %v1425, %v1430
      %v1435 = vmul.f32 %v1418, %v1434
      %v1437 = vperm.slane %v1412, 0
      %v1439 = vmul.f32 %v1435, %v1437
      %v1441 = vperm.slane %v1413, 0
      %v1443 = vadd.f32 %v1439, %v1441
      %v1444 = vpack.c.bf16 %v1443, %v1443
      %v1445 = vld [vmem:[%s677] sm:$0xf]
      %v1446 = vld [vmem:[%s677 + $0x4] sm:$0xf]
      %v1447 = vld [vmem:[%s677 + $0x8] sm:$0xf]
      %v1448 = vld [vmem:[%s677 + $0xc] sm:$0xf]
      %v1449 = vld [vmem:[%s680] sm:$0x1]
      %v1451 = vperm.slane %v1449, 0
      %v1457 = vunpack.c.l.b16 %v1445
      %v1458 = vunpack.c.l.b16 %v1446
      %v1459 = vunpack.c.l.b16 %v1447
      %v1460 = vunpack.c.l.b16 %v1448
      %v1461 = vpack.c.b16 %v1458, %v1457
      %v1462 = vpack.c.b16 %v1460, %v1459
      %v1466 = vsel %vm771, %v1444, 0
      %1468 = vmatpush.bf16.msra.mxu0 0
      %1469 = vmatpush.bf16.msra.mxu0 0
      %1470 = vmatpush.bf16.msra.mxu0 0
      %1471 = vmatpush.bf16.msra.mxu0 0
      %1472 = vmatpush.bf16.msra.mxu0 0
      %1473 = vmatpush.bf16.msra.mxu0 0
      %1474 = vmatpush.bf16.msra.mxu0 %v1462
      %1475 = vmatpush.bf16.msra.mxu0 %v1461
      %1476 = vmatmul.bf16.gmra.mxu0 %v1466
      %v1477 = vpop.f32.mrf.mxu0
      %v1478 = vadd.f32 %v1451, %v1477
      %v1479 = vpop.f32.mrf.mxu0
      %1480 = vdwg.mxu0
      %v1481 = vmul.f32 %v1478, 0.5
      %v1482 = vmul.f32 %v1478, 0.044715
      %v1483 = vmul.f32 %v1482, %v1478
      %v1484 = vmul.f32 %v1483, %v1478
      %v1485 = vadd.f32 %v1478, %v1484
      %v1486 = vmul.f32 %v1485, 0.7978846
      %v1487 = vtanh.pop %v1486
      %v1488 = vadd.f32 %v1487, 1.0
      %v1489 = vmul.f32 %v1481, %v1488
      %v1490 = vpack.c.bf16 %v1489, %v1489
      %v1491 = vld [vmem:[%s685] sm:$0xf]
      %v1492 = vld [vmem:[%s685 + $0x4] sm:$0xf]
      %v1493 = vld [vmem:[%s685 + $0x8] sm:$0xf]
      %v1494 = vld [vmem:[%s685 + $0xc] sm:$0xf]
      %v1495 = vld [vmem:[%s685 + $0x10] sm:$0xf]
      %v1496 = vld [vmem:[%s685 + $0x14] sm:$0xf]
      %v1497 = vld [vmem:[%s685 + $0x18] sm:$0xf]
      %v1498 = vld [vmem:[%s685 + $0x1c] sm:$0xf]
      %v1499 = vld [vmem:[%s688] sm:$0x1]
      %v1501 = vperm.slane %v1499, 0
      %v1511 = vunpack.c.l.b16 %v1491
      %v1512 = vunpack.c.l.b16 %v1492
      %v1513 = vunpack.c.l.b16 %v1493
      %v1514 = vunpack.c.l.b16 %v1494
      %v1515 = vunpack.c.l.b16 %v1495
      %v1516 = vunpack.c.l.b16 %v1496
      %v1517 = vunpack.c.l.b16 %v1497
      %v1518 = vunpack.c.l.b16 %v1498
      %v1519 = vpack.c.b16 %v1512, %v1511
      %v1520 = vpack.c.b16 %v1514, %v1513
      %v1521 = vpack.c.b16 %v1516, %v1515
      %v1522 = vpack.c.b16 %v1518, %v1517
      %vm1527 = vcmask 523264
      %v1529 = vsel %vm1527, %v1490, 0
      %1531 = vmatpush.bf16.msra.mxu0 0
      %1532 = vmatpush.bf16.msra.mxu0 0
      %1533 = vmatpush.bf16.msra.mxu0 0
      %1534 = vmatpush.bf16.msra.mxu0 0
      %1535 = vmatpush.bf16.msra.mxu0 %v1522
      %1536 = vmatpush.bf16.msra.mxu0 %v1521
      %1537 = vmatpush.bf16.msra.mxu0 %v1520
      %1538 = vmatpush.bf16.msra.mxu0 %v1519
      %1539 = vmatmul.bf16.gmra.mxu0 %v1529
      %v1540 = vpop.f32.mrf.mxu0
      %v1541 = vadd.f32 %v1501, %v1540
      %v1542 = vpop.f32.mrf.mxu0
      %1543 = vdwg.mxu0
      %v1544 = vadd.f32 %v1411, %v1541
      %p1545 = scmp.lt.s32.totalorder %s30, 1
      // Predicated region
      $region81: #{cxr_transformer_forward.1} parent=75 // pred_check
        %p1546 = pneg %p1545
      $region82: #{cxr_transformer_forward.1} parent=75 // pred_check_branch
        %1548 = sbr.rel (%p1546) target = $region84
      $region83: #{cxr_transformer_forward.1} parent=75 // pred_region
        %1549 = vst.msk [vmem:[#allocation2] sm:$0x1f] %vm704, %v1544
      $region84: #{cxr_transformer_forward.1} parent=75 // pred_fallthru
        _
      %p1550 = scmp.eq.s32.totalorder %s30, 1
      // Predicated region
      $region85: #{cxr_transformer_forward.1} parent=75 // pred_check
        %p1551 = pneg %p1550
      $region86: #{cxr_transformer_forward.1} parent=75 // pred_check_branch
        %1553 = sbr.rel (%p1551) target = $region88
      $region87: #{cxr_transformer_forward.1} parent=75 // pred_region
        %1554 = vst.msk [vmem:[%s692] sm:$0x1f] %vm704, %v1544
      $region88: #{cxr_transformer_forward.1} parent=75 // pred_fallthru
        _
      %p1555 = scmp.lt.s32.totalorder %s29, 1
      %s1556 = scalar_select %p1555, %s29, 1
      %s1557 = smul.addr %s1556, 8
      %s1558 = scalar_lea.vmem %s14, %s1557
      // Predicated region
      $region89: #{cxr_transformer_forward.1} parent=75 // pred_check
        %p1559 = pneg %p419
      $region90: #{cxr_transformer_forward.1} parent=75 // pred_check_branch
        %1561 = sbr.rel (%p1559) target = $region92
      $region91: #{cxr_transformer_forward.1} parent=75 // pred_region
        _
      $region92: #{cxr_transformer_forward.1} parent=75 // pred_fallthru
        _
    $region76: #{cxr_transformer_forward.1} parent=5 // pred_fallthru
      _
    %p1562 = scmp.le.s32.totalorder 2, %s20
    // Predicated region
    $region93: #{cxr_transformer_forward.1} parent=5 // pred_check
      %p1563 = pneg %p1562
    $region94: #{cxr_transformer_forward.1} parent=5 // pred_check_branch
      %1565 = sbr.rel (%p1563) target = $region96
    $region95: #{cxr_transformer_forward.1} parent=5 // pred_region
      %s1566 = ssub.s32 %s20, 2
      // Predicated region
      $region97: #{cxr_transformer_forward.1} parent=95 // pred_check
        %p1567 = pneg %p425
      $region98: #{cxr_transformer_forward.1} parent=95 // pred_check_branch
        %1569 = sbr.rel (%p1567) target = $region100
      $region99: #{cxr_transformer_forward.1} parent=95 // pred_region
        %p1570 = scmp.lt.s32.totalorder %s31, 1
        %s1571 = scalar_select %p1570, %s31, 1
        %s1572 = smul.addr %s1571, 8
        %s1573 = scalar_lea.vmem %s14, %s1572
      $region100: #{cxr_transformer_forward.1} parent=95 // pred_fallthru
        _
    $region96: #{cxr_transformer_forward.1} parent=5 // pred_fallthru
      _
  $region6: #{cxr_transformer_forward.1} parent=0 // loop_footer
    %s24 = sadd.s32 1, %s20
  $region7: #{cxr_transformer_forward.1} parent=0 // loop_footer_branch
    %19 = sbr.rel target = $region3
  $region8: #{cxr_transformer_forward.1} parent=0 // loop_exit
    _

</llo_original>
